<compile_context>
chip_gen: v7x
topology: tpu7x:2x2x1
jax: 0.10.0
libtpu: 0.0.40
codegen_flags: <defaults>
</compile_context>

<pallas_src>
import functools

import jax
import jax.numpy as jnp
from jax.experimental import pallas as pl
from jax.experimental.pallas import tpu as pltpu


def _round_up(x, m):
    return (x + m - 1) // m * m


def _autoencoder_kernel(x_ref,
                        w1_ref, w2_ref, w3_ref, w4_ref, w5_ref, w6_ref,
                        b_ref, out_ref, *, bias_offsets):
    """Fused forward: encoder (Linear,ReLU,Linear,ReLU,Linear) then
    decoder (Linear,ReLU,Linear,ReLU,Linear).

    Weights are bf16 (in, out); activations/accumulators are f32; biases live
    in one f32 slab sliced at static, lane-aligned offsets.
    """
    h = x_ref[...]  # (block_m, input_dim) f32

    def linear(h, w_ref, layer, relu):
        lo = bias_offsets[layer]
        hi = bias_offsets[layer + 1]
        b = b_ref[:, lo:hi]  # (1, out) f32, static lane-aligned slice
        y = jnp.dot(h.astype(jnp.bfloat16), w_ref[...],
                    preferred_element_type=jnp.float32)
        y = y + b
        if relu:
            y = jnp.maximum(y, 0.0)
        return y

    # encoder
    h = linear(h, w1_ref, 0, relu=True)    # input_dim      -> input_dim // 2
    h = linear(h, w2_ref, 1, relu=True)    # input_dim // 2 -> 256
    h = linear(h, w3_ref, 2, relu=False)   # 256            -> latent (padded to 128)
    # decoder
    h = linear(h, w4_ref, 3, relu=True)    # latent(padded) -> 256
    h = linear(h, w5_ref, 4, relu=True)    # 256            -> input_dim // 2
    h = linear(h, w6_ref, 5, relu=False)   # input_dim // 2 -> input_dim

    out_ref[...] = h.astype(out_ref.dtype)


def autoencoder_forward(x, params):
    """x: (batch, input_dim) f32.

    params: list of 6 (W, b), W (in, out) f32, b (1, out) f32, with the latent
    dimension already zero-padded to a multiple of 128 (see pad_latent).
    """
    batch, input_dim = x.shape

    # bf16 weights (halve HBM traffic); biases concatenated into one f32 slab.
    ws = [w.astype(jnp.bfloat16) for (w, _) in params]
    bs = [jnp.reshape(b, (1, -1)).astype(jnp.float32) for (_, b) in params]
    bias_slab = jnp.concatenate(bs, axis=1)
    offsets = [0]
    for b in bs:
        offsets.append(offsets[-1] + b.shape[1])

    # Batch grid: pad batch to a sublane multiple; cap the row block at 256.
    padded_batch = _round_up(max(batch, 8), 8)
    block_m = 256
    while padded_batch % block_m != 0:
        block_m //= 2  # terminates at >= 8 since padded_batch % 8 == 0

    x_p = x
    if padded_batch != batch:
        x_p = jnp.pad(x, ((0, padded_batch - batch), (0, 0)))

    grid = (padded_batch // block_m,)

    kernel = functools.partial(_autoencoder_kernel, bias_offsets=tuple(offsets))

    # Weights / bias slab stay VMEM-resident across all batch tiles
    # (constant index_map -> DMA'd once, no per-tile re-fetch).
    w_specs = [pl.BlockSpec(w.shape, lambda i: (0, 0)) for w in ws]
    bias_spec = pl.BlockSpec(bias_slab.shape, lambda i: (0, 0))

    out = pl.pallas_call(
        kernel,
        out_shape=jax.ShapeDtypeStruct((padded_batch, input_dim), jnp.float32),
        grid=grid,
        in_specs=[pl.BlockSpec((block_m, input_dim), lambda i: (i, 0))]
                 + w_specs + [bias_spec],
        out_specs=pl.BlockSpec((block_m, input_dim), lambda i: (i, 0)),
        compiler_params=pltpu.CompilerParams(
            dimension_semantics=("parallel",)),
    )(x_p, *ws, bias_slab)

    return out[:batch]


def init_params(key, input_dim, latent_dim):
    """Deterministic init mirroring the nn.Linear shapes of the PyTorch module."""
    dims = [
        (input_dim, input_dim // 2),      # encoder Linear 1
        (input_dim // 2, 256),            # encoder Linear 2
        (256, latent_dim),                # encoder Linear 3
        (latent_dim, 256),                # decoder Linear 1
        (256, input_dim // 2),            # decoder Linear 2
        (input_dim // 2, input_dim),      # decoder Linear 3
    ]
    params = []
    for (fan_in, fan_out) in dims:
        key, kw, kb = jax.random.split(key, 3)
        bound = 1.0 / (fan_in ** 0.5)  # PyTorch default uniform bound
        w = jax.random.uniform(kw, (fan_in, fan_out), jnp.float32, -bound, bound)
        b = jax.random.uniform(kb, (1, fan_out), jnp.float32, -bound, bound)
        params.append((w, b))
    return params


def pad_latent(params, latent_dim, latent_pad):
    """Zero-pad the latent projection to a lane multiple.  Exact: the padded
    latent columns are zero and multiply zero rows of the decoder's first
    weight; no ReLU sits between those two layers."""
    pad = latent_pad - latent_dim
    if pad == 0:
        return list(params)
    p = list(params)
    w3, b3 = p[2]
    w4, b4 = p[3]
    p[2] = (jnp.pad(w3, ((0, 0), (0, pad))), jnp.pad(b3, ((0, 0), (0, pad))))
    p[3] = (jnp.pad(w4, ((0, pad), (0, 0))), b4)
    return p


def reference_forward(x, params):
    """Pure-JAX reference with the same bf16-matmul / f32-accumulate numerics."""
    h = x
    for i, (w, b) in enumerate(params):
        h = jnp.dot(h.astype(jnp.bfloat16), w.astype(jnp.bfloat16),
                    preferred_element_type=jnp.float32) + b
        if i not in (2, 5):  # no ReLU after latent projection or final recon
            h = jnp.maximum(h, 0.0)
    return h


if __name__ == "__main__":
    input_dim = 512
    latent_dim = 100
    latent_pad = _round_up(latent_dim, 128)
    batch = 8

    key = jax.random.PRNGKey(0)
    key, kx = jax.random.split(key)
    x = jax.random.normal(kx, (batch, input_dim), jnp.float32)
    params = init_params(key, input_dim, latent_dim)
    padded_params = pad_latent(params, latent_dim, latent_pad)

    out = autoencoder_forward(x, padded_params)
    out = jax.block_until_ready(out)

    ref = reference_forward(x, padded_params)
    assert out.shape == (batch, input_dim)
    assert jnp.allclose(out, ref, atol=1e-3, rtol=1e-3), (
        "mismatch vs reference, max abs diff = %f"
        % float(jnp.max(jnp.abs(out - ref))))

    print("KERNEL_OK")
</pallas_src>

<mosaic_0001>
module attributes {stable_mosaic.version = 11 : i64} {
  func.func @_autoencoder_kernel(%arg0: i32, %arg1: memref<8x512xf32, #tpu.memory_space<vmem>>, %arg2: memref<512x256xbf16, #tpu.memory_space<vmem>>, %arg3: memref<256x256xbf16, #tpu.memory_space<vmem>>, %arg4: memref<256x128xbf16, #tpu.memory_space<vmem>>, %arg5: memref<128x256xbf16, #tpu.memory_space<vmem>>, %arg6: memref<256x256xbf16, #tpu.memory_space<vmem>>, %arg7: memref<256x512xbf16, #tpu.memory_space<vmem>>, %arg8: memref<1x1664xf32, #tpu.memory_space<vmem>>, %arg9: memref<8x512xf32, #tpu.memory_space<vmem>>) attributes {dimension_semantics = [#tpu.dimension_semantics<parallel>], iteration_bounds = array<i64: 1>, scalar_prefetch = 0 : i64, scratch_operands = 0 : i64, tpu.core_type = #tpu.core_type<tc>, window_params = [{transform_indices = @transform_0, window_bounds = array<i64: 8, 512>}, {pipeline_mode = #tpu.pipeline_mode<synchronous>, transform_indices = @transform_1, window_bounds = array<i64: 512, 256>}, {pipeline_mode = #tpu.pipeline_mode<synchronous>, transform_indices = @transform_2, window_bounds = array<i64: 256, 256>}, {pipeline_mode = #tpu.pipeline_mode<synchronous>, transform_indices = @transform_3, window_bounds = array<i64: 256, 128>}, {pipeline_mode = #tpu.pipeline_mode<synchronous>, transform_indices = @transform_4, window_bounds = array<i64: 128, 256>}, {pipeline_mode = #tpu.pipeline_mode<synchronous>, transform_indices = @transform_5, window_bounds = array<i64: 256, 256>}, {pipeline_mode = #tpu.pipeline_mode<synchronous>, transform_indices = @transform_6, window_bounds = array<i64: 256, 512>}, {pipeline_mode = #tpu.pipeline_mode<synchronous>, transform_indices = @transform_7, window_bounds = array<i64: 1, 1664>}, {transform_indices = @transform_8, window_bounds = array<i64: 8, 512>}]} {
    %c0 = arith.constant 0 : index
    %c0_0 = arith.constant 0 : index
    %0 = vector.load %arg1[%c0, %c0_0] : memref<8x512xf32, #tpu.memory_space<vmem>>, vector<8x512xf32>
    %c0_1 = arith.constant 0 : index
    %c0_2 = arith.constant 0 : index
    %1 = vector.load %arg8[%c0_1, %c0_2] : memref<1x1664xf32, #tpu.memory_space<vmem>>, vector<1x256xf32>
    %2 = arith.truncf %0 : vector<8x512xf32> to vector<8x512xbf16>
    %c0_3 = arith.constant 0 : index
    %c0_4 = arith.constant 0 : index
    %3 = vector.load %arg2[%c0_3, %c0_4] : memref<512x256xbf16, #tpu.memory_space<vmem>>, vector<512x256xbf16>
    %cst = arith.constant dense<0.000000e+00> : vector<8x256xf32>
    %4 = tpu.matmul %2, %3, %cst {dimension_numbers = #tpu.dot_dimension_numbers<[1], [0], [0], [1], [0, 0, 1, 1], [], []>} : vector<8x512xbf16>, vector<512x256xbf16>, vector<8x256xf32> -> vector<8x256xf32>
    %5 = vector.broadcast %1 : vector<1x256xf32> to vector<8x256xf32>
    %6 = arith.addf %4, %5 : vector<8x256xf32>
    %cst_5 = arith.constant 0.000000e+00 : f32
    %7 = vector.broadcast %cst_5 : f32 to vector<8x256xf32>
    %8 = arith.maximumf %6, %7 : vector<8x256xf32>
    %c0_6 = arith.constant 0 : index
    %c256 = arith.constant 256 : index
    %9 = vector.load %arg8[%c0_6, %c256] : memref<1x1664xf32, #tpu.memory_space<vmem>>, vector<1x256xf32>
    %10 = arith.truncf %8 : vector<8x256xf32> to vector<8x256xbf16>
    %c0_7 = arith.constant 0 : index
    %c0_8 = arith.constant 0 : index
    %11 = vector.load %arg3[%c0_7, %c0_8] : memref<256x256xbf16, #tpu.memory_space<vmem>>, vector<256x256xbf16>
    %cst_9 = arith.constant dense<0.000000e+00> : vector<8x256xf32>
    %12 = tpu.matmul %10, %11, %cst_9 {dimension_numbers = #tpu.dot_dimension_numbers<[1], [0], [0], [1], [0, 0, 1, 1], [], []>} : vector<8x256xbf16>, vector<256x256xbf16>, vector<8x256xf32> -> vector<8x256xf32>
    %13 = vector.broadcast %9 : vector<1x256xf32> to vector<8x256xf32>
    %14 = arith.addf %12, %13 : vector<8x256xf32>
    %cst_10 = arith.constant 0.000000e+00 : f32
    %15 = vector.broadcast %cst_10 : f32 to vector<8x256xf32>
    %16 = arith.maximumf %14, %15 : vector<8x256xf32>
    %c0_11 = arith.constant 0 : index
    %c512 = arith.constant 512 : index
    %17 = vector.load %arg8[%c0_11, %c512] : memref<1x1664xf32, #tpu.memory_space<vmem>>, vector<1x128xf32>
    %18 = arith.truncf %16 : vector<8x256xf32> to vector<8x256xbf16>
    %c0_12 = arith.constant 0 : index
    %c0_13 = arith.constant 0 : index
    %19 = vector.load %arg4[%c0_12, %c0_13] : memref<256x128xbf16, #tpu.memory_space<vmem>>, vector<256x128xbf16>
    %cst_14 = arith.constant dense<0.000000e+00> : vector<8x128xf32>
    %20 = tpu.matmul %18, %19, %cst_14 {dimension_numbers = #tpu.dot_dimension_numbers<[1], [0], [0], [1], [0, 0, 1, 1], [], []>} : vector<8x256xbf16>, vector<256x128xbf16>, vector<8x128xf32> -> vector<8x128xf32>
    %21 = vector.broadcast %17 : vector<1x128xf32> to vector<8x128xf32>
    %22 = arith.addf %20, %21 : vector<8x128xf32>
    %c0_15 = arith.constant 0 : index
    %c640 = arith.constant 640 : index
    %23 = vector.load %arg8[%c0_15, %c640] : memref<1x1664xf32, #tpu.memory_space<vmem>>, vector<1x256xf32>
    %24 = arith.truncf %22 : vector<8x128xf32> to vector<8x128xbf16>
    %c0_16 = arith.constant 0 : index
    %c0_17 = arith.constant 0 : index
    %25 = vector.load %arg5[%c0_16, %c0_17] : memref<128x256xbf16, #tpu.memory_space<vmem>>, vector<128x256xbf16>
    %cst_18 = arith.constant dense<0.000000e+00> : vector<8x256xf32>
    %26 = tpu.matmul %24, %25, %cst_18 {dimension_numbers = #tpu.dot_dimension_numbers<[1], [0], [0], [1], [0, 0, 1, 1], [], []>} : vector<8x128xbf16>, vector<128x256xbf16>, vector<8x256xf32> -> vector<8x256xf32>
    %27 = vector.broadcast %23 : vector<1x256xf32> to vector<8x256xf32>
    %28 = arith.addf %26, %27 : vector<8x256xf32>
    %cst_19 = arith.constant 0.000000e+00 : f32
    %29 = vector.broadcast %cst_19 : f32 to vector<8x256xf32>
    %30 = arith.maximumf %28, %29 : vector<8x256xf32>
    %c0_20 = arith.constant 0 : index
    %c896 = arith.constant 896 : index
    %31 = vector.load %arg8[%c0_20, %c896] : memref<1x1664xf32, #tpu.memory_space<vmem>>, vector<1x256xf32>
    %32 = arith.truncf %30 : vector<8x256xf32> to vector<8x256xbf16>
    %c0_21 = arith.constant 0 : index
    %c0_22 = arith.constant 0 : index
    %33 = vector.load %arg6[%c0_21, %c0_22] : memref<256x256xbf16, #tpu.memory_space<vmem>>, vector<256x256xbf16>
    %cst_23 = arith.constant dense<0.000000e+00> : vector<8x256xf32>
    %34 = tpu.matmul %32, %33, %cst_23 {dimension_numbers = #tpu.dot_dimension_numbers<[1], [0], [0], [1], [0, 0, 1, 1], [], []>} : vector<8x256xbf16>, vector<256x256xbf16>, vector<8x256xf32> -> vector<8x256xf32>
    %35 = vector.broadcast %31 : vector<1x256xf32> to vector<8x256xf32>
    %36 = arith.addf %34, %35 : vector<8x256xf32>
    %cst_24 = arith.constant 0.000000e+00 : f32
    %37 = vector.broadcast %cst_24 : f32 to vector<8x256xf32>
    %38 = arith.maximumf %36, %37 : vector<8x256xf32>
    %c0_25 = arith.constant 0 : index
    %c1152 = arith.constant 1152 : index
    %39 = vector.load %arg8[%c0_25, %c1152] : memref<1x1664xf32, #tpu.memory_space<vmem>>, vector<1x512xf32>
    %40 = arith.truncf %38 : vector<8x256xf32> to vector<8x256xbf16>
    %c0_26 = arith.constant 0 : index
    %c0_27 = arith.constant 0 : index
    %41 = vector.load %arg7[%c0_26, %c0_27] : memref<256x512xbf16, #tpu.memory_space<vmem>>, vector<256x512xbf16>
    %cst_28 = arith.constant dense<0.000000e+00> : vector<8x512xf32>
    %42 = tpu.matmul %40, %41, %cst_28 {dimension_numbers = #tpu.dot_dimension_numbers<[1], [0], [0], [1], [0, 0, 1, 1], [], []>} : vector<8x256xbf16>, vector<256x512xbf16>, vector<8x512xf32> -> vector<8x512xf32>
    %43 = vector.broadcast %39 : vector<1x512xf32> to vector<8x512xf32>
    %44 = arith.addf %42, %43 : vector<8x512xf32>
    %c0_29 = arith.constant 0 : index
    %c0_30 = arith.constant 0 : index
    %45 = vector.load %arg9[%c0_29, %c0_30] : memref<8x512xf32, #tpu.memory_space<vmem>>, vector<8x512xf32>
    tpu.vector_store %arg9[%c0_29, %c0_30], %44 {strides = array<i32>} : memref<8x512xf32, #tpu.memory_space<vmem>>, vector<8x512xf32>,
    return
  }
  func.func @transform_0(%arg0: i32) -> (i32, i32) {
    %c0_i32 = arith.constant 0 : i32
    %c0_i32_0 = arith.constant 0 : i32
    return %arg0, %c0_i32 : i32, i32
  }
  func.func @transform_1(%arg0: i32) -> (i32, i32) {
    %c0_i32 = arith.constant 0 : i32
    %c0_i32_0 = arith.constant 0 : i32
    %c0_i32_1 = arith.constant 0 : i32
    return %c0_i32, %c0_i32_0 : i32, i32
  }
  func.func @transform_2(%arg0: i32) -> (i32, i32) {
    %c0_i32 = arith.constant 0 : i32
    %c0_i32_0 = arith.constant 0 : i32
    %c0_i32_1 = arith.constant 0 : i32
    return %c0_i32, %c0_i32_0 : i32, i32
  }
  func.func @transform_3(%arg0: i32) -> (i32, i32) {
    %c0_i32 = arith.constant 0 : i32
    %c0_i32_0 = arith.constant 0 : i32
    %c0_i32_1 = arith.constant 0 : i32
    return %c0_i32, %c0_i32_0 : i32, i32
  }
  func.func @transform_4(%arg0: i32) -> (i32, i32) {
    %c0_i32 = arith.constant 0 : i32
    %c0_i32_0 = arith.constant 0 : i32
    %c0_i32_1 = arith.constant 0 : i32
    return %c0_i32, %c0_i32_0 : i32, i32
  }
  func.func @transform_5(%arg0: i32) -> (i32, i32) {
    %c0_i32 = arith.constant 0 : i32
    %c0_i32_0 = arith.constant 0 : i32
    %c0_i32_1 = arith.constant 0 : i32
    return %c0_i32, %c0_i32_0 : i32, i32
  }
  func.func @transform_6(%arg0: i32) -> (i32, i32) {
    %c0_i32 = arith.constant 0 : i32
    %c0_i32_0 = arith.constant 0 : i32
    %c0_i32_1 = arith.constant 0 : i32
    return %c0_i32, %c0_i32_0 : i32, i32
  }
  func.func @transform_7(%arg0: i32) -> (i32, i32) {
    %c0_i32 = arith.constant 0 : i32
    %c0_i32_0 = arith.constant 0 : i32
    %c0_i32_1 = arith.constant 0 : i32
    return %c0_i32, %c0_i32_0 : i32, i32
  }
  func.func @transform_8(%arg0: i32) -> (i32, i32) {
    %c0_i32 = arith.constant 0 : i32
    %c0_i32_0 = arith.constant 0 : i32
    return %arg0, %c0_i32 : i32, i32
  }
}

</mosaic_0001>

<llo_original>
// kernel: tpu_custom_call.1
$region0: #{tpu_custom_call.1}
  #allocation0 [shape = 'u32[]', space=smem, size = 0x4, offset = 0x4, fixed_abs, tag = 'smem constant byte address 0x4 - core index']
  #allocation1 [shape = 'u32[144,128]{1,0:T(1,128)}', space=vmem, size = 0x12000, scoped, tag = 'internal scratch']
  %s0 = inlined_call_operand.hbm [shape: f32[8,512], index: 0, kind: input, shape index: {}]
  %s1 = inlined_call_operand.hbm [shape: bf16[512,256], index: 1, kind: input, shape index: {}]
  %s2 = inlined_call_operand.hbm [shape: bf16[256,256], index: 2, kind: input, shape index: {}]
  %s3 = inlined_call_operand.hbm [shape: bf16[256,128], index: 3, kind: input, shape index: {}]
  %s4 = inlined_call_operand.hbm [shape: bf16[128,256], index: 4, kind: input, shape index: {}]
  %s5 = inlined_call_operand.hbm [shape: bf16[256,256], index: 5, kind: input, shape index: {}]
  %s6 = inlined_call_operand.hbm [shape: bf16[256,512], index: 6, kind: input, shape index: {}]
  %s7 = inlined_call_operand.vmem [shape: f32[1,1664], index: 7, kind: input, shape index: {}]
  %s8 = inlined_call_operand.hbm [shape: f32[8,512], index: 8, kind: output, shape index: {}]
  %s9 = sld [smem:[#allocation0]]
  $region70: #{tpu_custom_call.1} parent=0
    _
  %s11 = ssub.s32 1, %s9
  %s12 = scalar_select 0, %s11, %s9
  $region1: #{tpu_custom_call.1} parent=0
    #allocation2 [shape = 'u8[16384]{0}', space=vmem, size = 0x4000, scoped, tag = 'input window, operand 0, single buffered']
    #allocation3 [shape = 's32[1]{0}', space=sflag, size = 0x4, scoped, tag = 'scoped memory for tpu_custom_call.1']
    #allocation4 [shape = 's32[1]{0}', space=sflag, size = 0x4, scoped, tag = 'scoped memory for tpu_custom_call.1']
    #allocation5 [shape = 'u8[262144]{0}', space=vmem, size = 0x40000, scoped, tag = 'input window, operand 1, single buffered']
    #allocation6 [shape = 's32[1]{0}', space=sflag, size = 0x4, scoped, tag = 'scoped memory for tpu_custom_call.1']
    #allocation7 [shape = 'u8[131072]{0}', space=vmem, size = 0x20000, scoped, tag = 'input window, operand 2, single buffered']
    #allocation8 [shape = 'u8[65536]{0}', space=vmem, size = 0x10000, scoped, tag = 'input window, operand 3, single buffered']
    #allocation9 [shape = 's32[1]{0}', space=sflag, size = 0x4, scoped, tag = 'scoped memory for tpu_custom_call.1']
    #allocation10 [shape = 'u8[65536]{0}', space=vmem, size = 0x10000, scoped, tag = 'input window, operand 4, single buffered']
    #allocation11 [shape = 'u8[131072]{0}', space=vmem, size = 0x20000, scoped, tag = 'input window, operand 5, single buffered']
    #allocation12 [shape = 's32[1]{0}', space=sflag, size = 0x4, scoped, tag = 'scoped memory for tpu_custom_call.1']
    #allocation13 [shape = 'u8[262144]{0}', space=vmem, size = 0x40000, scoped, tag = 'input window, operand 6, single buffered']
    #allocation14 [shape = 'u8[16384]{0}', space=vmem, size = 0x4000, scoped, tag = 'output window, operand 0, single buffered']
    %13 = vsyncpa [#allocation3], 0
    %14 = vsyncpa [#allocation6], 0
    %15 = vsyncpa [#allocation9], 0
    %16 = vsyncpa [#allocation12], 0
    %17 = vsyncpa [#allocation4], 0
    // Predicated region
    $region2: #{tpu_custom_call.1} parent=1 // pred_check
      _
    $region3: #{tpu_custom_call.1} parent=1 // pred_check_branch
      %19 = sbr.rel (0) target = $region5
    $region4: #{tpu_custom_call.1} parent=1 // pred_region
      %s21 = ssub.s32 512, 512
      %22 = vsyncadd [#allocation3], %s21
      %s24 = sshll.u32 [#allocation2], 4
      %s25 = int_to_ptr.vmem [resolvable:$true] %s24
      %27 = dma.hbm_to_vmem [thread:$0]  %s0, 512, %s25, [#allocation3]
    $region5: #{tpu_custom_call.1} parent=1 // pred_fallthru
      _
    // Predicated region
    $region6: #{tpu_custom_call.1} parent=1 // pred_check
      _
    $region7: #{tpu_custom_call.1} parent=1 // pred_check_branch
      %29 = sbr.rel (0) target = $region9
    $region8: #{tpu_custom_call.1} parent=1 // pred_region
      %s31 = ssub.s32 8192, 8192
      %32 = vsyncadd [#allocation6], %s31
      %s33 = sshll.u32 [#allocation5], 4
      %s34 = int_to_ptr.vmem [resolvable:$true] %s33
      %39 = dma.hbm_to_vmem [thread:$0]  %s1, 8192, %s34, [#allocation6], 128, 128, 8
    $region9: #{tpu_custom_call.1} parent=1 // pred_fallthru
      _
    // Predicated region
    $region10: #{tpu_custom_call.1} parent=1 // pred_check
      _
    $region11: #{tpu_custom_call.1} parent=1 // pred_check_branch
      %41 = sbr.rel (0) target = $region13
    $region12: #{tpu_custom_call.1} parent=1 // pred_region
      %s43 = ssub.s32 4096, 4096
      %44 = vsyncadd [#allocation6], %s43
      %s45 = sshll.u32 [#allocation7], 4
      %s46 = int_to_ptr.vmem [resolvable:$true] %s45
      %51 = dma.hbm_to_vmem [thread:$0]  %s2, 4096, %s46, [#allocation6], 128, 128, 8
    $region13: #{tpu_custom_call.1} parent=1 // pred_fallthru
      _
    // Predicated region
    $region14: #{tpu_custom_call.1} parent=1 // pred_check
      _
    $region15: #{tpu_custom_call.1} parent=1 // pred_check_branch
      %53 = sbr.rel (0) target = $region17
    $region16: #{tpu_custom_call.1} parent=1 // pred_region
      %s55 = ssub.s32 2048, 2048
      %56 = vsyncadd [#allocation9], %s55
      %s57 = sshll.u32 [#allocation8], 4
      %s58 = int_to_ptr.vmem [resolvable:$true] %s57
      %63 = dma.hbm_to_vmem [thread:$0]  %s3, 2048, %s58, [#allocation9], 64, 64, 4
    $region17: #{tpu_custom_call.1} parent=1 // pred_fallthru
      _
    // Predicated region
    $region18: #{tpu_custom_call.1} parent=1 // pred_check
      _
    $region19: #{tpu_custom_call.1} parent=1 // pred_check_branch
      %65 = sbr.rel (0) target = $region21
    $region20: #{tpu_custom_call.1} parent=1 // pred_region
      %s67 = ssub.s32 2048, 2048
      %68 = vsyncadd [#allocation9], %s67
      %s69 = sshll.u32 [#allocation10], 4
      %s70 = int_to_ptr.vmem [resolvable:$true] %s69
      %75 = dma.hbm_to_vmem [thread:$0]  %s4, 2048, %s70, [#allocation9], 128, 128, 8
    $region21: #{tpu_custom_call.1} parent=1 // pred_fallthru
      _
    // Predicated region
    $region22: #{tpu_custom_call.1} parent=1 // pred_check
      _
    $region23: #{tpu_custom_call.1} parent=1 // pred_check_branch
      %77 = sbr.rel (0) target = $region25
    $region24: #{tpu_custom_call.1} parent=1 // pred_region
      %s79 = ssub.s32 4096, 4096
      %80 = vsyncadd [#allocation12], %s79
      %s81 = sshll.u32 [#allocation11], 4
      %s82 = int_to_ptr.vmem [resolvable:$true] %s81
      %87 = dma.hbm_to_vmem [thread:$0]  %s5, 4096, %s82, [#allocation12], 128, 128, 8
    $region25: #{tpu_custom_call.1} parent=1 // pred_fallthru
      _
    // Predicated region
    $region26: #{tpu_custom_call.1} parent=1 // pred_check
      _
    $region27: #{tpu_custom_call.1} parent=1 // pred_check_branch
      %89 = sbr.rel (0) target = $region29
    $region28: #{tpu_custom_call.1} parent=1 // pred_region
      %s91 = ssub.s32 8192, 8192
      %92 = vsyncadd [#allocation12], %s91
      %s93 = sshll.u32 [#allocation13], 4
      %s94 = int_to_ptr.vmem [resolvable:$true] %s93
      %99 = dma.hbm_to_vmem [thread:$0]  %s6, 8192, %s94, [#allocation12], 256, 256, 16
    $region29: #{tpu_custom_call.1} parent=1 // pred_fallthru
      _
    // Predicated region
    $region30: #{tpu_custom_call.1} parent=1 // pred_check
      _
    $region31: #{tpu_custom_call.1} parent=1 // pred_check_branch
      %101 = sbr.rel (0) target = $region33
    $region32: #{tpu_custom_call.1} parent=1 // pred_region
      _
    $region33: #{tpu_custom_call.1} parent=1 // pred_fallthru
      _
    // Predicated region
    $region34: #{tpu_custom_call.1} parent=1 // pred_check
      _
    $region35: #{tpu_custom_call.1} parent=1 // pred_check_branch
      %103 = sbr.rel (0) target = $region37
    $region36: #{tpu_custom_call.1} parent=1 // pred_region
      %104 = dma.done [#allocation3], 512
    $region37: #{tpu_custom_call.1} parent=1 // pred_fallthru
      _
    // Predicated region
    $region38: #{tpu_custom_call.1} parent=1 // pred_check
      _
    $region39: #{tpu_custom_call.1} parent=1 // pred_check_branch
      %106 = sbr.rel (0) target = $region41
    $region40: #{tpu_custom_call.1} parent=1 // pred_region
      %107 = dma.done [#allocation6], 8192
    $region41: #{tpu_custom_call.1} parent=1 // pred_fallthru
      _
    // Predicated region
    $region42: #{tpu_custom_call.1} parent=1 // pred_check
      _
    $region43: #{tpu_custom_call.1} parent=1 // pred_check_branch
      %109 = sbr.rel (0) target = $region45
    $region44: #{tpu_custom_call.1} parent=1 // pred_region
      %110 = dma.done [#allocation6], 4096
    $region45: #{tpu_custom_call.1} parent=1 // pred_fallthru
      _
    // Predicated region
    $region46: #{tpu_custom_call.1} parent=1 // pred_check
      _
    $region47: #{tpu_custom_call.1} parent=1 // pred_check_branch
      %112 = sbr.rel (0) target = $region49
    $region48: #{tpu_custom_call.1} parent=1 // pred_region
      %113 = dma.done [#allocation9], 2048
    $region49: #{tpu_custom_call.1} parent=1 // pred_fallthru
      _
    // Predicated region
    $region50: #{tpu_custom_call.1} parent=1 // pred_check
      _
    $region51: #{tpu_custom_call.1} parent=1 // pred_check_branch
      %115 = sbr.rel (0) target = $region53
    $region52: #{tpu_custom_call.1} parent=1 // pred_region
      %116 = dma.done [#allocation9], 2048
    $region53: #{tpu_custom_call.1} parent=1 // pred_fallthru
      _
    // Predicated region
    $region54: #{tpu_custom_call.1} parent=1 // pred_check
      _
    $region55: #{tpu_custom_call.1} parent=1 // pred_check_branch
      %118 = sbr.rel (0) target = $region57
    $region56: #{tpu_custom_call.1} parent=1 // pred_region
      %119 = dma.done [#allocation12], 4096
    $region57: #{tpu_custom_call.1} parent=1 // pred_fallthru
      _
    // Predicated region
    $region58: #{tpu_custom_call.1} parent=1 // pred_check
      _
    $region59: #{tpu_custom_call.1} parent=1 // pred_check_branch
      %121 = sbr.rel (0) target = $region61
    $region60: #{tpu_custom_call.1} parent=1 // pred_region
      %122 = dma.done [#allocation12], 8192
    $region61: #{tpu_custom_call.1} parent=1 // pred_fallthru
      _
    %v124 = vld [vmem:[#allocation2] sm:$0xff]
    %v125 = vld [vmem:[#allocation2 + $0x8] sm:$0xff]
    %v126 = vld [vmem:[#allocation2 + $0x10] sm:$0xff]
    %v127 = vld [vmem:[#allocation2 + $0x18] sm:$0xff]
    %v128 = vld [vmem:[%s7] sm:$0x3]
    %v129 = vpack.c.bf16 %v124, %v124
    %v130 = vpack.c.bf16 %v125, %v125
    %v131 = vpack.c.bf16 %v126, %v126
    %v132 = vpack.c.bf16 %v127, %v127
    %v133 = vld [vmem:[#allocation5] sm:$0xff]
    %v134 = vld [vmem:[#allocation5 + $0x8] sm:$0xff]
    %v135 = vld [vmem:[#allocation5 + $0x10] sm:$0xff]
    %v136 = vld [vmem:[#allocation5 + $0x18] sm:$0xff]
    %v137 = vld [vmem:[#allocation5 + $0x20] sm:$0xff]
    %v138 = vld [vmem:[#allocation5 + $0x28] sm:$0xff]
    %v139 = vld [vmem:[#allocation5 + $0x30] sm:$0xff]
    %v140 = vld [vmem:[#allocation5 + $0x38] sm:$0xff]
    %v141 = vld [vmem:[#allocation5 + $0x40] sm:$0xff]
    %v142 = vld [vmem:[#allocation5 + $0x48] sm:$0xff]
    %v143 = vld [vmem:[#allocation5 + $0x50] sm:$0xff]
    %v144 = vld [vmem:[#allocation5 + $0x58] sm:$0xff]
    %v145 = vld [vmem:[#allocation5 + $0x60] sm:$0xff]
    %v146 = vld [vmem:[#allocation5 + $0x68] sm:$0xff]
    %v147 = vld [vmem:[#allocation5 + $0x70] sm:$0xff]
    %v148 = vld [vmem:[#allocation5 + $0x78] sm:$0xff]
    %v149 = vld [vmem:[#allocation5 + $0x80] sm:$0xff]
    %v150 = vld [vmem:[#allocation5 + $0x88] sm:$0xff]
    %v151 = vld [vmem:[#allocation5 + $0x90] sm:$0xff]
    %v152 = vld [vmem:[#allocation5 + $0x98] sm:$0xff]
    %v153 = vld [vmem:[#allocation5 + $0xa0] sm:$0xff]
    %v154 = vld [vmem:[#allocation5 + $0xa8] sm:$0xff]
    %v155 = vld [vmem:[#allocation5 + $0xb0] sm:$0xff]
    %v156 = vld [vmem:[#allocation5 + $0xb8] sm:$0xff]
    %v157 = vld [vmem:[#allocation5 + $0xc0] sm:$0xff]
    %v158 = vld [vmem:[#allocation5 + $0xc8] sm:$0xff]
    %v159 = vld [vmem:[#allocation5 + $0xd0] sm:$0xff]
    %v160 = vld [vmem:[#allocation5 + $0xd8] sm:$0xff]
    %v161 = vld [vmem:[#allocation5 + $0xe0] sm:$0xff]
    %v162 = vld [vmem:[#allocation5 + $0xe8] sm:$0xff]
    %v163 = vld [vmem:[#allocation5 + $0xf0] sm:$0xff]
    %v164 = vld [vmem:[#allocation5 + $0xf8] sm:$0xff]
    %v165 = vld [vmem:[#allocation5 + $0x100] sm:$0xff]
    %v166 = vld [vmem:[#allocation5 + $0x108] sm:$0xff]
    %v167 = vld [vmem:[#allocation5 + $0x110] sm:$0xff]
    %v168 = vld [vmem:[#allocation5 + $0x118] sm:$0xff]
    %v169 = vld [vmem:[#allocation5 + $0x120] sm:$0xff]
    %v170 = vld [vmem:[#allocation5 + $0x128] sm:$0xff]
    %v171 = vld [vmem:[#allocation5 + $0x130] sm:$0xff]
    %v172 = vld [vmem:[#allocation5 + $0x138] sm:$0xff]
    %v173 = vld [vmem:[#allocation5 + $0x140] sm:$0xff]
    %v174 = vld [vmem:[#allocation5 + $0x148] sm:$0xff]
    %v175 = vld [vmem:[#allocation5 + $0x150] sm:$0xff]
    %v176 = vld [vmem:[#allocation5 + $0x158] sm:$0xff]
    %v177 = vld [vmem:[#allocation5 + $0x160] sm:$0xff]
    %v178 = vld [vmem:[#allocation5 + $0x168] sm:$0xff]
    %v179 = vld [vmem:[#allocation5 + $0x170] sm:$0xff]
    %v180 = vld [vmem:[#allocation5 + $0x178] sm:$0xff]
    %v181 = vld [vmem:[#allocation5 + $0x180] sm:$0xff]
    %v182 = vld [vmem:[#allocation5 + $0x188] sm:$0xff]
    %v183 = vld [vmem:[#allocation5 + $0x190] sm:$0xff]
    %v184 = vld [vmem:[#allocation5 + $0x198] sm:$0xff]
    %v185 = vld [vmem:[#allocation5 + $0x1a0] sm:$0xff]
    %v186 = vld [vmem:[#allocation5 + $0x1a8] sm:$0xff]
    %v187 = vld [vmem:[#allocation5 + $0x1b0] sm:$0xff]
    %v188 = vld [vmem:[#allocation5 + $0x1b8] sm:$0xff]
    %v189 = vld [vmem:[#allocation5 + $0x1c0] sm:$0xff]
    %v190 = vld [vmem:[#allocation5 + $0x1c8] sm:$0xff]
    %v191 = vld [vmem:[#allocation5 + $0x1d0] sm:$0xff]
    %v192 = vld [vmem:[#allocation5 + $0x1d8] sm:$0xff]
    %v193 = vld [vmem:[#allocation5 + $0x1e0] sm:$0xff]
    %v194 = vld [vmem:[#allocation5 + $0x1e8] sm:$0xff]
    %v195 = vld [vmem:[#allocation5 + $0x1f0] sm:$0xff]
    %v196 = vld [vmem:[#allocation5 + $0x1f8] sm:$0xff]
    %v198 = vlaneseq
    %v199 = vshrl.u32 %v198, 7
    %v200 = vsub.s32 0, %v199
    %v201 = vrot.slane %v128, %v200
    %v202 = vlaneseq
    %v203 = vshrl.u32 %v202, 7
    %v204 = vsub.s32 1, %v203
    %v205 = vrot.slane %v128, %v204
    %v272 = vunpack.c.l.b16 %v133
    %v273 = vunpack.c.h.b16 %v133
    %v274 = vunpack.c.l.b16 %v134
    %v275 = vunpack.c.h.b16 %v134
    %v276 = vunpack.c.l.b16 %v135
    %v277 = vunpack.c.h.b16 %v135
    %v278 = vunpack.c.l.b16 %v136
    %v279 = vunpack.c.h.b16 %v136
    %v280 = vunpack.c.l.b16 %v137
    %v281 = vunpack.c.h.b16 %v137
    %v282 = vunpack.c.l.b16 %v138
    %v283 = vunpack.c.h.b16 %v138
    %v284 = vunpack.c.l.b16 %v139
    %v285 = vunpack.c.h.b16 %v139
    %v286 = vunpack.c.l.b16 %v140
    %v287 = vunpack.c.h.b16 %v140
    %v288 = vunpack.c.l.b16 %v141
    %v289 = vunpack.c.h.b16 %v141
    %v290 = vunpack.c.l.b16 %v142
    %v291 = vunpack.c.h.b16 %v142
    %v292 = vunpack.c.l.b16 %v143
    %v293 = vunpack.c.h.b16 %v143
    %v294 = vunpack.c.l.b16 %v144
    %v295 = vunpack.c.h.b16 %v144
    %v296 = vunpack.c.l.b16 %v145
    %v297 = vunpack.c.h.b16 %v145
    %v298 = vunpack.c.l.b16 %v146
    %v299 = vunpack.c.h.b16 %v146
    %v300 = vunpack.c.l.b16 %v147
    %v301 = vunpack.c.h.b16 %v147
    %v302 = vunpack.c.l.b16 %v148
    %v303 = vunpack.c.h.b16 %v148
    %v304 = vunpack.c.l.b16 %v149
    %v305 = vunpack.c.h.b16 %v149
    %v306 = vunpack.c.l.b16 %v150
    %v307 = vunpack.c.h.b16 %v150
    %v308 = vunpack.c.l.b16 %v151
    %v309 = vunpack.c.h.b16 %v151
    %v310 = vunpack.c.l.b16 %v152
    %v311 = vunpack.c.h.b16 %v152
    %v312 = vunpack.c.l.b16 %v153
    %v313 = vunpack.c.h.b16 %v153
    %v314 = vunpack.c.l.b16 %v154
    %v315 = vunpack.c.h.b16 %v154
    %v316 = vunpack.c.l.b16 %v155
    %v317 = vunpack.c.h.b16 %v155
    %v318 = vunpack.c.l.b16 %v156
    %v319 = vunpack.c.h.b16 %v156
    %v320 = vunpack.c.l.b16 %v157
    %v321 = vunpack.c.h.b16 %v157
    %v322 = vunpack.c.l.b16 %v158
    %v323 = vunpack.c.h.b16 %v158
    %v324 = vunpack.c.l.b16 %v159
    %v325 = vunpack.c.h.b16 %v159
    %v326 = vunpack.c.l.b16 %v160
    %v327 = vunpack.c.h.b16 %v160
    %v328 = vunpack.c.l.b16 %v161
    %v329 = vunpack.c.h.b16 %v161
    %v330 = vunpack.c.l.b16 %v162
    %v331 = vunpack.c.h.b16 %v162
    %v332 = vunpack.c.l.b16 %v163
    %v333 = vunpack.c.h.b16 %v163
    %v334 = vunpack.c.l.b16 %v164
    %v335 = vunpack.c.h.b16 %v164
    %v336 = vunpack.c.l.b16 %v165
    %v337 = vunpack.c.h.b16 %v165
    %v338 = vunpack.c.l.b16 %v166
    %v339 = vunpack.c.h.b16 %v166
    %v340 = vunpack.c.l.b16 %v167
    %v341 = vunpack.c.h.b16 %v167
    %v342 = vunpack.c.l.b16 %v168
    %v343 = vunpack.c.h.b16 %v168
    %v344 = vunpack.c.l.b16 %v169
    %v345 = vunpack.c.h.b16 %v169
    %v346 = vunpack.c.l.b16 %v170
    %v347 = vunpack.c.h.b16 %v170
    %v348 = vunpack.c.l.b16 %v171
    %v349 = vunpack.c.h.b16 %v171
    %v350 = vunpack.c.l.b16 %v172
    %v351 = vunpack.c.h.b16 %v172
    %v352 = vunpack.c.l.b16 %v173
    %v353 = vunpack.c.h.b16 %v173
    %v354 = vunpack.c.l.b16 %v174
    %v355 = vunpack.c.h.b16 %v174
    %v356 = vunpack.c.l.b16 %v175
    %v357 = vunpack.c.h.b16 %v175
    %v358 = vunpack.c.l.b16 %v176
    %v359 = vunpack.c.h.b16 %v176
    %v360 = vunpack.c.l.b16 %v177
    %v361 = vunpack.c.h.b16 %v177
    %v362 = vunpack.c.l.b16 %v178
    %v363 = vunpack.c.h.b16 %v178
    %v364 = vunpack.c.l.b16 %v179
    %v365 = vunpack.c.h.b16 %v179
    %v366 = vunpack.c.l.b16 %v180
    %v367 = vunpack.c.h.b16 %v180
    %v368 = vunpack.c.l.b16 %v181
    %v369 = vunpack.c.h.b16 %v181
    %v370 = vunpack.c.l.b16 %v182
    %v371 = vunpack.c.h.b16 %v182
    %v372 = vunpack.c.l.b16 %v183
    %v373 = vunpack.c.h.b16 %v183
    %v374 = vunpack.c.l.b16 %v184
    %v375 = vunpack.c.h.b16 %v184
    %v376 = vunpack.c.l.b16 %v185
    %v377 = vunpack.c.h.b16 %v185
    %v378 = vunpack.c.l.b16 %v186
    %v379 = vunpack.c.h.b16 %v186
    %v380 = vunpack.c.l.b16 %v187
    %v381 = vunpack.c.h.b16 %v187
    %v382 = vunpack.c.l.b16 %v188
    %v383 = vunpack.c.h.b16 %v188
    %v384 = vunpack.c.l.b16 %v189
    %v385 = vunpack.c.h.b16 %v189
    %v386 = vunpack.c.l.b16 %v190
    %v387 = vunpack.c.h.b16 %v190
    %v388 = vunpack.c.l.b16 %v191
    %v389 = vunpack.c.h.b16 %v191
    %v390 = vunpack.c.l.b16 %v192
    %v391 = vunpack.c.h.b16 %v192
    %v392 = vunpack.c.l.b16 %v193
    %v393 = vunpack.c.h.b16 %v193
    %v394 = vunpack.c.l.b16 %v194
    %v395 = vunpack.c.h.b16 %v194
    %v396 = vunpack.c.l.b16 %v195
    %v397 = vunpack.c.h.b16 %v195
    %v398 = vunpack.c.l.b16 %v196
    %v399 = vunpack.c.h.b16 %v196
    %v400 = vpack.c.b16 %v274, %v272
    %v401 = vpack.c.b16 %v275, %v273
    %v402 = vpack.c.b16 %v278, %v276
    %v403 = vpack.c.b16 %v279, %v277
    %v404 = vpack.c.b16 %v282, %v280
    %v405 = vpack.c.b16 %v283, %v281
    %v406 = vpack.c.b16 %v286, %v284
    %v407 = vpack.c.b16 %v287, %v285
    %v408 = vpack.c.b16 %v290, %v288
    %v409 = vpack.c.b16 %v291, %v289
    %v410 = vpack.c.b16 %v294, %v292
    %v411 = vpack.c.b16 %v295, %v293
    %v412 = vpack.c.b16 %v298, %v296
    %v413 = vpack.c.b16 %v299, %v297
    %v414 = vpack.c.b16 %v302, %v300
    %v415 = vpack.c.b16 %v303, %v301
    %v416 = vpack.c.b16 %v306, %v304
    %v417 = vpack.c.b16 %v307, %v305
    %v418 = vpack.c.b16 %v310, %v308
    %v419 = vpack.c.b16 %v311, %v309
    %v420 = vpack.c.b16 %v314, %v312
    %v421 = vpack.c.b16 %v315, %v313
    %v422 = vpack.c.b16 %v318, %v316
    %v423 = vpack.c.b16 %v319, %v317
    %v424 = vpack.c.b16 %v322, %v320
    %v425 = vpack.c.b16 %v323, %v321
    %v426 = vpack.c.b16 %v326, %v324
    %v427 = vpack.c.b16 %v327, %v325
    %v428 = vpack.c.b16 %v330, %v328
    %v429 = vpack.c.b16 %v331, %v329
    %v430 = vpack.c.b16 %v334, %v332
    %v431 = vpack.c.b16 %v335, %v333
    %v432 = vpack.c.b16 %v338, %v336
    %v433 = vpack.c.b16 %v339, %v337
    %v434 = vpack.c.b16 %v342, %v340
    %v435 = vpack.c.b16 %v343, %v341
    %v436 = vpack.c.b16 %v346, %v344
    %v437 = vpack.c.b16 %v347, %v345
    %v438 = vpack.c.b16 %v350, %v348
    %v439 = vpack.c.b16 %v351, %v349
    %v440 = vpack.c.b16 %v354, %v352
    %v441 = vpack.c.b16 %v355, %v353
    %v442 = vpack.c.b16 %v358, %v356
    %v443 = vpack.c.b16 %v359, %v357
    %v444 = vpack.c.b16 %v362, %v360
    %v445 = vpack.c.b16 %v363, %v361
    %v446 = vpack.c.b16 %v366, %v364
    %v447 = vpack.c.b16 %v367, %v365
    %v448 = vpack.c.b16 %v370, %v368
    %v449 = vpack.c.b16 %v371, %v369
    %v450 = vpack.c.b16 %v374, %v372
    %v451 = vpack.c.b16 %v375, %v373
    %v452 = vpack.c.b16 %v378, %v376
    %v453 = vpack.c.b16 %v379, %v377
    %v454 = vpack.c.b16 %v382, %v380
    %v455 = vpack.c.b16 %v383, %v381
    %v456 = vpack.c.b16 %v386, %v384
    %v457 = vpack.c.b16 %v387, %v385
    %v458 = vpack.c.b16 %v390, %v388
    %v459 = vpack.c.b16 %v391, %v389
    %v460 = vpack.c.b16 %v394, %v392
    %v461 = vpack.c.b16 %v395, %v393
    %v462 = vpack.c.b16 %v398, %v396
    %v463 = vpack.c.b16 %v399, %v397
    %528 = vmatprep.subr.bf16.mxu0 %v401
    %529 = vmatpush1.bf16.msra.mxu0 %v400
    %530 = vmatprep.subr.bf16.mxu0 %v403
    %531 = vmatpush1.bf16.msra.mxu0 %v402
    %532 = vmatprep.subr.bf16.mxu0 %v405
    %533 = vmatpush1.bf16.msra.mxu0 %v404
    %534 = vmatprep.subr.bf16.mxu0 %v407
    %535 = vmatpush1.bf16.msra.mxu0 %v406
    %536 = vmatprep.subr.bf16.mxu0 %v409
    %537 = vmatpush1.bf16.msra.mxu0 %v408
    %538 = vmatprep.subr.bf16.mxu0 %v411
    %539 = vmatpush1.bf16.msra.mxu0 %v410
    %540 = vmatprep.subr.bf16.mxu0 %v413
    %541 = vmatpush1.bf16.msra.mxu0 %v412
    %542 = vmatprep.subr.bf16.mxu0 %v415
    %543 = vmatpush1.bf16.msra.mxu0 %v414
    %544 = vmatprep.subr.bf16.mxu0 %v417
    %545 = vmatpush1.bf16.msra.mxu0 %v416
    %546 = vmatprep.subr.bf16.mxu0 %v419
    %547 = vmatpush1.bf16.msra.mxu0 %v418
    %548 = vmatprep.subr.bf16.mxu0 %v421
    %549 = vmatpush1.bf16.msra.mxu0 %v420
    %550 = vmatprep.subr.bf16.mxu0 %v423
    %551 = vmatpush1.bf16.msra.mxu0 %v422
    %552 = vmatprep.subr.bf16.mxu0 %v425
    %553 = vmatpush1.bf16.msra.mxu0 %v424
    %554 = vmatprep.subr.bf16.mxu0 %v427
    %555 = vmatpush1.bf16.msra.mxu0 %v426
    %556 = vmatprep.subr.bf16.mxu0 %v429
    %557 = vmatpush1.bf16.msra.mxu0 %v428
    %558 = vmatprep.subr.bf16.mxu0 %v431
    %559 = vmatpush1.bf16.msra.mxu0 %v430
    %560 = vmatprep.mubr.bf16.mxu0 %v130
    %561 = vmatmul.mubr.bf16.gmra.mrb[0].mxu0 %v129
    %v562 = vpop.f32.mrb[0].mxu0
    %v563 = vadd.f32 %v201, %v562
    %v564 = vpop.f32.mrb[0].mxu0
    %v565 = vadd.f32 %v205, %v564
    %v566 = vpop.f32.mrb[0].mxu0
    %v567 = vpop.f32.mrb[0].mxu0
    %568 = vdwg.mxu0
    %569 = vmatprep.subr.bf16.mxu0 %v433
    %570 = vmatpush1.bf16.msra.mxu0 %v432
    %571 = vmatprep.subr.bf16.mxu0 %v435
    %572 = vmatpush1.bf16.msra.mxu0 %v434
    %573 = vmatprep.subr.bf16.mxu0 %v437
    %574 = vmatpush1.bf16.msra.mxu0 %v436
    %575 = vmatprep.subr.bf16.mxu0 %v439
    %576 = vmatpush1.bf16.msra.mxu0 %v438
    %577 = vmatprep.subr.bf16.mxu0 %v441
    %578 = vmatpush1.bf16.msra.mxu0 %v440
    %579 = vmatprep.subr.bf16.mxu0 %v443
    %580 = vmatpush1.bf16.msra.mxu0 %v442
    %581 = vmatprep.subr.bf16.mxu0 %v445
    %582 = vmatpush1.bf16.msra.mxu0 %v444
    %583 = vmatprep.subr.bf16.mxu0 %v447
    %584 = vmatpush1.bf16.msra.mxu0 %v446
    %585 = vmatprep.subr.bf16.mxu0 %v449
    %586 = vmatpush1.bf16.msra.mxu0 %v448
    %587 = vmatprep.subr.bf16.mxu0 %v451
    %588 = vmatpush1.bf16.msra.mxu0 %v450
    %589 = vmatprep.subr.bf16.mxu0 %v453
    %590 = vmatpush1.bf16.msra.mxu0 %v452
    %591 = vmatprep.subr.bf16.mxu0 %v455
    %592 = vmatpush1.bf16.msra.mxu0 %v454
    %593 = vmatprep.subr.bf16.mxu0 %v457
    %594 = vmatpush1.bf16.msra.mxu0 %v456
    %595 = vmatprep.subr.bf16.mxu0 %v459
    %596 = vmatpush1.bf16.msra.mxu0 %v458
    %597 = vmatprep.subr.bf16.mxu0 %v461
    %598 = vmatpush1.bf16.msra.mxu0 %v460
    %599 = vmatprep.subr.bf16.mxu0 %v463
    %600 = vmatpush1.bf16.msra.mxu0 %v462
    %601 = vmatprep.mubr.bf16.mxu0 %v132
    %602 = vmatmul.mubr.bf16.gmra.mrb[0].mxu0 %v131
    %v603 = vpop.f32.mrb[0].mxu0
    %v604 = vadd.f32 %v563, %v603
    %v605 = vpop.f32.mrb[0].mxu0
    %v606 = vadd.f32 %v565, %v605
    %v607 = vpop.f32.mrb[0].mxu0
    %v608 = vpop.f32.mrb[0].mxu0
    %609 = vdwg.mxu0
    %v610 = vmax.f32 %v604, 0.0
    %v611 = vmax.f32 %v606, 0.0
    %v612 = vld [vmem:[%s7 + $0x2] sm:$0x3]
    %v613 = vpack.c.bf16 %v610, %v610
    %v614 = vpack.c.bf16 %v611, %v611
    %v615 = vld [vmem:[#allocation7] sm:$0xff]
    %v616 = vld [vmem:[#allocation7 + $0x8] sm:$0xff]
    %v617 = vld [vmem:[#allocation7 + $0x10] sm:$0xff]
    %v618 = vld [vmem:[#allocation7 + $0x18] sm:$0xff]
    %v619 = vld [vmem:[#allocation7 + $0x20] sm:$0xff]
    %v620 = vld [vmem:[#allocation7 + $0x28] sm:$0xff]
    %v621 = vld [vmem:[#allocation7 + $0x30] sm:$0xff]
    %v622 = vld [vmem:[#allocation7 + $0x38] sm:$0xff]
    %v623 = vld [vmem:[#allocation7 + $0x40] sm:$0xff]
    %v624 = vld [vmem:[#allocation7 + $0x48] sm:$0xff]
    %v625 = vld [vmem:[#allocation7 + $0x50] sm:$0xff]
    %v626 = vld [vmem:[#allocation7 + $0x58] sm:$0xff]
    %v627 = vld [vmem:[#allocation7 + $0x60] sm:$0xff]
    %v628 = vld [vmem:[#allocation7 + $0x68] sm:$0xff]
    %v629 = vld [vmem:[#allocation7 + $0x70] sm:$0xff]
    %v630 = vld [vmem:[#allocation7 + $0x78] sm:$0xff]
    %v631 = vld [vmem:[#allocation7 + $0x80] sm:$0xff]
    %v632 = vld [vmem:[#allocation7 + $0x88] sm:$0xff]
    %v633 = vld [vmem:[#allocation7 + $0x90] sm:$0xff]
    %v634 = vld [vmem:[#allocation7 + $0x98] sm:$0xff]
    %v635 = vld [vmem:[#allocation7 + $0xa0] sm:$0xff]
    %v636 = vld [vmem:[#allocation7 + $0xa8] sm:$0xff]
    %v637 = vld [vmem:[#allocation7 + $0xb0] sm:$0xff]
    %v638 = vld [vmem:[#allocation7 + $0xb8] sm:$0xff]
    %v639 = vld [vmem:[#allocation7 + $0xc0] sm:$0xff]
    %v640 = vld [vmem:[#allocation7 + $0xc8] sm:$0xff]
    %v641 = vld [vmem:[#allocation7 + $0xd0] sm:$0xff]
    %v642 = vld [vmem:[#allocation7 + $0xd8] sm:$0xff]
    %v643 = vld [vmem:[#allocation7 + $0xe0] sm:$0xff]
    %v644 = vld [vmem:[#allocation7 + $0xe8] sm:$0xff]
    %v645 = vld [vmem:[#allocation7 + $0xf0] sm:$0xff]
    %v646 = vld [vmem:[#allocation7 + $0xf8] sm:$0xff]
    %v648 = vlaneseq
    %v649 = vshrl.u32 %v648, 7
    %v650 = vsub.s32 0, %v649
    %v651 = vrot.slane %v612, %v650
    %v652 = vlaneseq
    %v653 = vshrl.u32 %v652, 7
    %v654 = vsub.s32 1, %v653
    %v655 = vrot.slane %v612, %v654
    %v690 = vunpack.c.l.b16 %v615
    %v691 = vunpack.c.h.b16 %v615
    %v692 = vunpack.c.l.b16 %v616
    %v693 = vunpack.c.h.b16 %v616
    %v694 = vunpack.c.l.b16 %v617
    %v695 = vunpack.c.h.b16 %v617
    %v696 = vunpack.c.l.b16 %v618
    %v697 = vunpack.c.h.b16 %v618
    %v698 = vunpack.c.l.b16 %v619
    %v699 = vunpack.c.h.b16 %v619
    %v700 = vunpack.c.l.b16 %v620
    %v701 = vunpack.c.h.b16 %v620
    %v702 = vunpack.c.l.b16 %v621
    %v703 = vunpack.c.h.b16 %v621
    %v704 = vunpack.c.l.b16 %v622
    %v705 = vunpack.c.h.b16 %v622
    %v706 = vunpack.c.l.b16 %v623
    %v707 = vunpack.c.h.b16 %v623
    %v708 = vunpack.c.l.b16 %v624
    %v709 = vunpack.c.h.b16 %v624
    %v710 = vunpack.c.l.b16 %v625
    %v711 = vunpack.c.h.b16 %v625
    %v712 = vunpack.c.l.b16 %v626
    %v713 = vunpack.c.h.b16 %v626
    %v714 = vunpack.c.l.b16 %v627
    %v715 = vunpack.c.h.b16 %v627
    %v716 = vunpack.c.l.b16 %v628
    %v717 = vunpack.c.h.b16 %v628
    %v718 = vunpack.c.l.b16 %v629
    %v719 = vunpack.c.h.b16 %v629
    %v720 = vunpack.c.l.b16 %v630
    %v721 = vunpack.c.h.b16 %v630
    %v722 = vunpack.c.l.b16 %v631
    %v723 = vunpack.c.h.b16 %v631
    %v724 = vunpack.c.l.b16 %v632
    %v725 = vunpack.c.h.b16 %v632
    %v726 = vunpack.c.l.b16 %v633
    %v727 = vunpack.c.h.b16 %v633
    %v728 = vunpack.c.l.b16 %v634
    %v729 = vunpack.c.h.b16 %v634
    %v730 = vunpack.c.l.b16 %v635
    %v731 = vunpack.c.h.b16 %v635
    %v732 = vunpack.c.l.b16 %v636
    %v733 = vunpack.c.h.b16 %v636
    %v734 = vunpack.c.l.b16 %v637
    %v735 = vunpack.c.h.b16 %v637
    %v736 = vunpack.c.l.b16 %v638
    %v737 = vunpack.c.h.b16 %v638
    %v738 = vunpack.c.l.b16 %v639
    %v739 = vunpack.c.h.b16 %v639
    %v740 = vunpack.c.l.b16 %v640
    %v741 = vunpack.c.h.b16 %v640
    %v742 = vunpack.c.l.b16 %v641
    %v743 = vunpack.c.h.b16 %v641
    %v744 = vunpack.c.l.b16 %v642
    %v745 = vunpack.c.h.b16 %v642
    %v746 = vunpack.c.l.b16 %v643
    %v747 = vunpack.c.h.b16 %v643
    %v748 = vunpack.c.l.b16 %v644
    %v749 = vunpack.c.h.b16 %v644
    %v750 = vunpack.c.l.b16 %v645
    %v751 = vunpack.c.h.b16 %v645
    %v752 = vunpack.c.l.b16 %v646
    %v753 = vunpack.c.h.b16 %v646
    %v754 = vpack.c.b16 %v692, %v690
    %v755 = vpack.c.b16 %v693, %v691
    %v756 = vpack.c.b16 %v696, %v694
    %v757 = vpack.c.b16 %v697, %v695
    %v758 = vpack.c.b16 %v700, %v698
    %v759 = vpack.c.b16 %v701, %v699
    %v760 = vpack.c.b16 %v704, %v702
    %v761 = vpack.c.b16 %v705, %v703
    %v762 = vpack.c.b16 %v708, %v706
    %v763 = vpack.c.b16 %v709, %v707
    %v764 = vpack.c.b16 %v712, %v710
    %v765 = vpack.c.b16 %v713, %v711
    %v766 = vpack.c.b16 %v716, %v714
    %v767 = vpack.c.b16 %v717, %v715
    %v768 = vpack.c.b16 %v720, %v718
    %v769 = vpack.c.b16 %v721, %v719
    %v770 = vpack.c.b16 %v724, %v722
    %v771 = vpack.c.b16 %v725, %v723
    %v772 = vpack.c.b16 %v728, %v726
    %v773 = vpack.c.b16 %v729, %v727
    %v774 = vpack.c.b16 %v732, %v730
    %v775 = vpack.c.b16 %v733, %v731
    %v776 = vpack.c.b16 %v736, %v734
    %v777 = vpack.c.b16 %v737, %v735
    %v778 = vpack.c.b16 %v740, %v738
    %v779 = vpack.c.b16 %v741, %v739
    %v780 = vpack.c.b16 %v744, %v742
    %v781 = vpack.c.b16 %v745, %v743
    %v782 = vpack.c.b16 %v748, %v746
    %v783 = vpack.c.b16 %v749, %v747
    %v784 = vpack.c.b16 %v752, %v750
    %v785 = vpack.c.b16 %v753, %v751
    %818 = vmatprep.subr.bf16.mxu0 %v755
    %819 = vmatpush1.bf16.msra.mxu0 %v754
    %820 = vmatprep.subr.bf16.mxu0 %v757
    %821 = vmatpush1.bf16.msra.mxu0 %v756
    %822 = vmatprep.subr.bf16.mxu0 %v759
    %823 = vmatpush1.bf16.msra.mxu0 %v758
    %824 = vmatprep.subr.bf16.mxu0 %v761
    %825 = vmatpush1.bf16.msra.mxu0 %v760
    %826 = vmatprep.subr.bf16.mxu0 %v763
    %827 = vmatpush1.bf16.msra.mxu0 %v762
    %828 = vmatprep.subr.bf16.mxu0 %v765
    %829 = vmatpush1.bf16.msra.mxu0 %v764
    %830 = vmatprep.subr.bf16.mxu0 %v767
    %831 = vmatpush1.bf16.msra.mxu0 %v766
    %832 = vmatprep.subr.bf16.mxu0 %v769
    %833 = vmatpush1.bf16.msra.mxu0 %v768
    %834 = vmatprep.subr.bf16.mxu0 %v771
    %835 = vmatpush1.bf16.msra.mxu0 %v770
    %836 = vmatprep.subr.bf16.mxu0 %v773
    %837 = vmatpush1.bf16.msra.mxu0 %v772
    %838 = vmatprep.subr.bf16.mxu0 %v775
    %839 = vmatpush1.bf16.msra.mxu0 %v774
    %840 = vmatprep.subr.bf16.mxu0 %v777
    %841 = vmatpush1.bf16.msra.mxu0 %v776
    %842 = vmatprep.subr.bf16.mxu0 %v779
    %843 = vmatpush1.bf16.msra.mxu0 %v778
    %844 = vmatprep.subr.bf16.mxu0 %v781
    %845 = vmatpush1.bf16.msra.mxu0 %v780
    %846 = vmatprep.subr.bf16.mxu0 %v783
    %847 = vmatpush1.bf16.msra.mxu0 %v782
    %848 = vmatprep.subr.bf16.mxu0 %v785
    %849 = vmatpush1.bf16.msra.mxu0 %v784
    %850 = vmatprep.mubr.bf16.mxu0 %v614
    %851 = vmatmul.mubr.bf16.gmra.mrb[0].mxu0 %v613
    %v852 = vpop.f32.mrb[0].mxu0
    %v853 = vadd.f32 %v651, %v852
    %v854 = vpop.f32.mrb[0].mxu0
    %v855 = vadd.f32 %v655, %v854
    %v856 = vpop.f32.mrb[0].mxu0
    %v857 = vpop.f32.mrb[0].mxu0
    %858 = vdwg.mxu0
    %v859 = vmax.f32 %v853, 0.0
    %v860 = vmax.f32 %v855, 0.0
    %v861 = vld [vmem:[%s7 + $0x4] sm:$0x1]
    %v862 = vpack.c.bf16 %v859, %v859
    %v863 = vpack.c.bf16 %v860, %v860
    %v864 = vld [vmem:[#allocation8] sm:$0xf]
    %v865 = vld [vmem:[#allocation8 + $0x4] sm:$0xf]
    %v866 = vld [vmem:[#allocation8 + $0x8] sm:$0xf]
    %v867 = vld [vmem:[#allocation8 + $0xc] sm:$0xf]
    %v868 = vld [vmem:[#allocation8 + $0x10] sm:$0xf]
    %v869 = vld [vmem:[#allocation8 + $0x14] sm:$0xf]
    %v870 = vld [vmem:[#allocation8 + $0x18] sm:$0xf]
    %v871 = vld [vmem:[#allocation8 + $0x1c] sm:$0xf]
    %v872 = vld [vmem:[#allocation8 + $0x20] sm:$0xf]
    %v873 = vld [vmem:[#allocation8 + $0x24] sm:$0xf]
    %v874 = vld [vmem:[#allocation8 + $0x28] sm:$0xf]
    %v875 = vld [vmem:[#allocation8 + $0x2c] sm:$0xf]
    %v876 = vld [vmem:[#allocation8 + $0x30] sm:$0xf]
    %v877 = vld [vmem:[#allocation8 + $0x34] sm:$0xf]
    %v878 = vld [vmem:[#allocation8 + $0x38] sm:$0xf]
    %v879 = vld [vmem:[#allocation8 + $0x3c] sm:$0xf]
    %v880 = vld [vmem:[#allocation8 + $0x40] sm:$0xf]
    %v881 = vld [vmem:[#allocation8 + $0x44] sm:$0xf]
    %v882 = vld [vmem:[#allocation8 + $0x48] sm:$0xf]
    %v883 = vld [vmem:[#allocation8 + $0x4c] sm:$0xf]
    %v884 = vld [vmem:[#allocation8 + $0x50] sm:$0xf]
    %v885 = vld [vmem:[#allocation8 + $0x54] sm:$0xf]
    %v886 = vld [vmem:[#allocation8 + $0x58] sm:$0xf]
    %v887 = vld [vmem:[#allocation8 + $0x5c] sm:$0xf]
    %v888 = vld [vmem:[#allocation8 + $0x60] sm:$0xf]
    %v889 = vld [vmem:[#allocation8 + $0x64] sm:$0xf]
    %v890 = vld [vmem:[#allocation8 + $0x68] sm:$0xf]
    %v891 = vld [vmem:[#allocation8 + $0x6c] sm:$0xf]
    %v892 = vld [vmem:[#allocation8 + $0x70] sm:$0xf]
    %v893 = vld [vmem:[#allocation8 + $0x74] sm:$0xf]
    %v894 = vld [vmem:[#allocation8 + $0x78] sm:$0xf]
    %v895 = vld [vmem:[#allocation8 + $0x7c] sm:$0xf]
    %v897 = vlaneseq
    %v898 = vshrl.u32 %v897, 7
    %v899 = vsub.s32 0, %v898
    %v900 = vrot.slane %v861, %v899
    %v934 = vunpack.c.l.b16 %v864
    %v935 = vunpack.c.l.b16 %v865
    %v936 = vunpack.c.l.b16 %v866
    %v937 = vunpack.c.l.b16 %v867
    %v938 = vunpack.c.l.b16 %v868
    %v939 = vunpack.c.l.b16 %v869
    %v940 = vunpack.c.l.b16 %v870
    %v941 = vunpack.c.l.b16 %v871
    %v942 = vunpack.c.l.b16 %v872
    %v943 = vunpack.c.l.b16 %v873
    %v944 = vunpack.c.l.b16 %v874
    %v945 = vunpack.c.l.b16 %v875
    %v946 = vunpack.c.l.b16 %v876
    %v947 = vunpack.c.l.b16 %v877
    %v948 = vunpack.c.l.b16 %v878
    %v949 = vunpack.c.l.b16 %v879
    %v950 = vunpack.c.l.b16 %v880
    %v951 = vunpack.c.l.b16 %v881
    %v952 = vunpack.c.l.b16 %v882
    %v953 = vunpack.c.l.b16 %v883
    %v954 = vunpack.c.l.b16 %v884
    %v955 = vunpack.c.l.b16 %v885
    %v956 = vunpack.c.l.b16 %v886
    %v957 = vunpack.c.l.b16 %v887
    %v958 = vunpack.c.l.b16 %v888
    %v959 = vunpack.c.l.b16 %v889
    %v960 = vunpack.c.l.b16 %v890
    %v961 = vunpack.c.l.b16 %v891
    %v962 = vunpack.c.l.b16 %v892
    %v963 = vunpack.c.l.b16 %v893
    %v964 = vunpack.c.l.b16 %v894
    %v965 = vunpack.c.l.b16 %v895
    %v966 = vpack.c.b16 %v935, %v934
    %v967 = vpack.c.b16 %v937, %v936
    %v968 = vpack.c.b16 %v939, %v938
    %v969 = vpack.c.b16 %v941, %v940
    %v970 = vpack.c.b16 %v943, %v942
    %v971 = vpack.c.b16 %v945, %v944
    %v972 = vpack.c.b16 %v947, %v946
    %v973 = vpack.c.b16 %v949, %v948
    %v974 = vpack.c.b16 %v951, %v950
    %v975 = vpack.c.b16 %v953, %v952
    %v976 = vpack.c.b16 %v955, %v954
    %v977 = vpack.c.b16 %v957, %v956
    %v978 = vpack.c.b16 %v959, %v958
    %v979 = vpack.c.b16 %v961, %v960
    %v980 = vpack.c.b16 %v963, %v962
    %v981 = vpack.c.b16 %v965, %v964
    %998 = vmatprep.subr.bf16.mxu0 0
    %999 = vmatpush1.bf16.msra.mxu0 %v966
    %1000 = vmatprep.subr.bf16.mxu0 0
    %1001 = vmatpush1.bf16.msra.mxu0 %v967
    %1002 = vmatprep.subr.bf16.mxu0 0
    %1003 = vmatpush1.bf16.msra.mxu0 %v968
    %1004 = vmatprep.subr.bf16.mxu0 0
    %1005 = vmatpush1.bf16.msra.mxu0 %v969
    %1006 = vmatprep.subr.bf16.mxu0 0
    %1007 = vmatpush1.bf16.msra.mxu0 %v970
    %1008 = vmatprep.subr.bf16.mxu0 0
    %1009 = vmatpush1.bf16.msra.mxu0 %v971
    %1010 = vmatprep.subr.bf16.mxu0 0
    %1011 = vmatpush1.bf16.msra.mxu0 %v972
    %1012 = vmatprep.subr.bf16.mxu0 0
    %1013 = vmatpush1.bf16.msra.mxu0 %v973
    %1014 = vmatprep.subr.bf16.mxu0 0
    %1015 = vmatpush1.bf16.msra.mxu0 %v974
    %1016 = vmatprep.subr.bf16.mxu0 0
    %1017 = vmatpush1.bf16.msra.mxu0 %v975
    %1018 = vmatprep.subr.bf16.mxu0 0
    %1019 = vmatpush1.bf16.msra.mxu0 %v976
    %1020 = vmatprep.subr.bf16.mxu0 0
    %1021 = vmatpush1.bf16.msra.mxu0 %v977
    %1022 = vmatprep.subr.bf16.mxu0 0
    %1023 = vmatpush1.bf16.msra.mxu0 %v978
    %1024 = vmatprep.subr.bf16.mxu0 0
    %1025 = vmatpush1.bf16.msra.mxu0 %v979
    %1026 = vmatprep.subr.bf16.mxu0 0
    %1027 = vmatpush1.bf16.msra.mxu0 %v980
    %1028 = vmatprep.subr.bf16.mxu0 0
    %1029 = vmatpush1.bf16.msra.mxu0 %v981
    %1030 = vmatprep.mubr.bf16.mxu0 %v863
    %1031 = vmatmul.mubr.bf16.gmra.mrb[0].mxu0 %v862
    %v1032 = vpop.f32.mrb[0].mxu0
    %v1033 = vadd.f32 %v900, %v1032
    %v1034 = vpop.f32.mrb[0].mxu0
    %v1035 = vpop.f32.mrb[0].mxu0
    %v1036 = vpop.f32.mrb[0].mxu0
    %1037 = vdwg.mxu0
    %v1038 = vld [vmem:[%s7 + $0x5] sm:$0x3]
    %v1039 = vpack.c.bf16 %v1033, %v1033
    %v1040 = vld [vmem:[#allocation10] sm:$0xff]
    %v1041 = vld [vmem:[#allocation10 + $0x8] sm:$0xff]
    %v1042 = vld [vmem:[#allocation10 + $0x10] sm:$0xff]
    %v1043 = vld [vmem:[#allocation10 + $0x18] sm:$0xff]
    %v1044 = vld [vmem:[#allocation10 + $0x20] sm:$0xff]
    %v1045 = vld [vmem:[#allocation10 + $0x28] sm:$0xff]
    %v1046 = vld [vmem:[#allocation10 + $0x30] sm:$0xff]
    %v1047 = vld [vmem:[#allocation10 + $0x38] sm:$0xff]
    %v1048 = vld [vmem:[#allocation10 + $0x40] sm:$0xff]
    %v1049 = vld [vmem:[#allocation10 + $0x48] sm:$0xff]
    %v1050 = vld [vmem:[#allocation10 + $0x50] sm:$0xff]
    %v1051 = vld [vmem:[#allocation10 + $0x58] sm:$0xff]
    %v1052 = vld [vmem:[#allocation10 + $0x60] sm:$0xff]
    %v1053 = vld [vmem:[#allocation10 + $0x68] sm:$0xff]
    %v1054 = vld [vmem:[#allocation10 + $0x70] sm:$0xff]
    %v1055 = vld [vmem:[#allocation10 + $0x78] sm:$0xff]
    %v1057 = vlaneseq
    %v1058 = vshrl.u32 %v1057, 7
    %v1059 = vsub.s32 0, %v1058
    %v1060 = vrot.slane %v1038, %v1059
    %v1061 = vlaneseq
    %v1062 = vshrl.u32 %v1061, 7
    %v1063 = vsub.s32 1, %v1062
    %v1064 = vrot.slane %v1038, %v1063
    %v1083 = vunpack.c.l.b16 %v1040
    %v1084 = vunpack.c.h.b16 %v1040
    %v1085 = vunpack.c.l.b16 %v1041
    %v1086 = vunpack.c.h.b16 %v1041
    %v1087 = vunpack.c.l.b16 %v1042
    %v1088 = vunpack.c.h.b16 %v1042
    %v1089 = vunpack.c.l.b16 %v1043
    %v1090 = vunpack.c.h.b16 %v1043
    %v1091 = vunpack.c.l.b16 %v1044
    %v1092 = vunpack.c.h.b16 %v1044
    %v1093 = vunpack.c.l.b16 %v1045
    %v1094 = vunpack.c.h.b16 %v1045
    %v1095 = vunpack.c.l.b16 %v1046
    %v1096 = vunpack.c.h.b16 %v1046
    %v1097 = vunpack.c.l.b16 %v1047
    %v1098 = vunpack.c.h.b16 %v1047
    %v1099 = vunpack.c.l.b16 %v1048
    %v1100 = vunpack.c.h.b16 %v1048
    %v1101 = vunpack.c.l.b16 %v1049
    %v1102 = vunpack.c.h.b16 %v1049
    %v1103 = vunpack.c.l.b16 %v1050
    %v1104 = vunpack.c.h.b16 %v1050
    %v1105 = vunpack.c.l.b16 %v1051
    %v1106 = vunpack.c.h.b16 %v1051
    %v1107 = vunpack.c.l.b16 %v1052
    %v1108 = vunpack.c.h.b16 %v1052
    %v1109 = vunpack.c.l.b16 %v1053
    %v1110 = vunpack.c.h.b16 %v1053
    %v1111 = vunpack.c.l.b16 %v1054
    %v1112 = vunpack.c.h.b16 %v1054
    %v1113 = vunpack.c.l.b16 %v1055
    %v1114 = vunpack.c.h.b16 %v1055
    %v1115 = vpack.c.b16 %v1085, %v1083
    %v1116 = vpack.c.b16 %v1086, %v1084
    %v1117 = vpack.c.b16 %v1089, %v1087
    %v1118 = vpack.c.b16 %v1090, %v1088
    %v1119 = vpack.c.b16 %v1093, %v1091
    %v1120 = vpack.c.b16 %v1094, %v1092
    %v1121 = vpack.c.b16 %v1097, %v1095
    %v1122 = vpack.c.b16 %v1098, %v1096
    %v1123 = vpack.c.b16 %v1101, %v1099
    %v1124 = vpack.c.b16 %v1102, %v1100
    %v1125 = vpack.c.b16 %v1105, %v1103
    %v1126 = vpack.c.b16 %v1106, %v1104
    %v1127 = vpack.c.b16 %v1109, %v1107
    %v1128 = vpack.c.b16 %v1110, %v1108
    %v1129 = vpack.c.b16 %v1113, %v1111
    %v1130 = vpack.c.b16 %v1114, %v1112
    %1147 = vmatprep.subr.bf16.mxu0 %v1116
    %1148 = vmatpush1.bf16.msra.mxu0 %v1115
    %1149 = vmatprep.subr.bf16.mxu0 %v1118
    %1150 = vmatpush1.bf16.msra.mxu0 %v1117
    %1151 = vmatprep.subr.bf16.mxu0 %v1120
    %1152 = vmatpush1.bf16.msra.mxu0 %v1119
    %1153 = vmatprep.subr.bf16.mxu0 %v1122
    %1154 = vmatpush1.bf16.msra.mxu0 %v1121
    %1155 = vmatprep.subr.bf16.mxu0 %v1124
    %1156 = vmatpush1.bf16.msra.mxu0 %v1123
    %1157 = vmatprep.subr.bf16.mxu0 %v1126
    %1158 = vmatpush1.bf16.msra.mxu0 %v1125
    %1159 = vmatprep.subr.bf16.mxu0 %v1128
    %1160 = vmatpush1.bf16.msra.mxu0 %v1127
    %1161 = vmatprep.subr.bf16.mxu0 %v1130
    %1162 = vmatpush1.bf16.msra.mxu0 %v1129
    %1163 = vmatprep.subr.bf16.mxu0 0
    %1164 = vmatpush1.bf16.msra.mxu0 0
    %1165 = vmatprep.subr.bf16.mxu0 0
    %1166 = vmatpush1.bf16.msra.mxu0 0
    %1167 = vmatprep.subr.bf16.mxu0 0
    %1168 = vmatpush1.bf16.msra.mxu0 0
    %1169 = vmatprep.subr.bf16.mxu0 0
    %1170 = vmatpush1.bf16.msra.mxu0 0
    %1171 = vmatprep.subr.bf16.mxu0 0
    %1172 = vmatpush1.bf16.msra.mxu0 0
    %1173 = vmatprep.subr.bf16.mxu0 0
    %1174 = vmatpush1.bf16.msra.mxu0 0
    %1175 = vmatprep.subr.bf16.mxu0 0
    %1176 = vmatpush1.bf16.msra.mxu0 0
    %1177 = vmatprep.subr.bf16.mxu0 0
    %1178 = vmatpush1.bf16.msra.mxu0 0
    %1179 = vmatprep.mubr.bf16.mxu0 0
    %1180 = vmatmul.mubr.bf16.gmra.mrb[0].mxu0 %v1039
    %v1181 = vpop.f32.mrb[0].mxu0
    %v1182 = vadd.f32 %v1060, %v1181
    %v1183 = vpop.f32.mrb[0].mxu0
    %v1184 = vadd.f32 %v1064, %v1183
    %v1185 = vpop.f32.mrb[0].mxu0
    %v1186 = vpop.f32.mrb[0].mxu0
    %1187 = vdwg.mxu0
    %v1188 = vmax.f32 %v1182, 0.0
    %v1189 = vmax.f32 %v1184, 0.0
    %v1190 = vld [vmem:[%s7 + $0x7] sm:$0x3]
    %v1191 = vpack.c.bf16 %v1188, %v1188
    %v1192 = vpack.c.bf16 %v1189, %v1189
    %v1193 = vld [vmem:[#allocation11] sm:$0xff]
    %v1194 = vld [vmem:[#allocation11 + $0x8] sm:$0xff]
    %v1195 = vld [vmem:[#allocation11 + $0x10] sm:$0xff]
    %v1196 = vld [vmem:[#allocation11 + $0x18] sm:$0xff]
    %v1197 = vld [vmem:[#allocation11 + $0x20] sm:$0xff]
    %v1198 = vld [vmem:[#allocation11 + $0x28] sm:$0xff]
    %v1199 = vld [vmem:[#allocation11 + $0x30] sm:$0xff]
    %v1200 = vld [vmem:[#allocation11 + $0x38] sm:$0xff]
    %v1201 = vld [vmem:[#allocation11 + $0x40] sm:$0xff]
    %v1202 = vld [vmem:[#allocation11 + $0x48] sm:$0xff]
    %v1203 = vld [vmem:[#allocation11 + $0x50] sm:$0xff]
    %v1204 = vld [vmem:[#allocation11 + $0x58] sm:$0xff]
    %v1205 = vld [vmem:[#allocation11 + $0x60] sm:$0xff]
    %v1206 = vld [vmem:[#allocation11 + $0x68] sm:$0xff]
    %v1207 = vld [vmem:[#allocation11 + $0x70] sm:$0xff]
    %v1208 = vld [vmem:[#allocation11 + $0x78] sm:$0xff]
    %v1209 = vld [vmem:[#allocation11 + $0x80] sm:$0xff]
    %v1210 = vld [vmem:[#allocation11 + $0x88] sm:$0xff]
    %v1211 = vld [vmem:[#allocation11 + $0x90] sm:$0xff]
    %v1212 = vld [vmem:[#allocation11 + $0x98] sm:$0xff]
    %v1213 = vld [vmem:[#allocation11 + $0xa0] sm:$0xff]
    %v1214 = vld [vmem:[#allocation11 + $0xa8] sm:$0xff]
    %v1215 = vld [vmem:[#allocation11 + $0xb0] sm:$0xff]
    %v1216 = vld [vmem:[#allocation11 + $0xb8] sm:$0xff]
    %v1217 = vld [vmem:[#allocation11 + $0xc0] sm:$0xff]
    %v1218 = vld [vmem:[#allocation11 + $0xc8] sm:$0xff]
    %v1219 = vld [vmem:[#allocation11 + $0xd0] sm:$0xff]
    %v1220 = vld [vmem:[#allocation11 + $0xd8] sm:$0xff]
    %v1221 = vld [vmem:[#allocation11 + $0xe0] sm:$0xff]
    %v1222 = vld [vmem:[#allocation11 + $0xe8] sm:$0xff]
    %v1223 = vld [vmem:[#allocation11 + $0xf0] sm:$0xff]
    %v1224 = vld [vmem:[#allocation11 + $0xf8] sm:$0xff]
    %v1226 = vlaneseq
    %v1227 = vshrl.u32 %v1226, 7
    %v1228 = vsub.s32 0, %v1227
    %v1229 = vrot.slane %v1190, %v1228
    %v1230 = vlaneseq
    %v1231 = vshrl.u32 %v1230, 7
    %v1232 = vsub.s32 1, %v1231
    %v1233 = vrot.slane %v1190, %v1232
    %v1268 = vunpack.c.l.b16 %v1193
    %v1269 = vunpack.c.h.b16 %v1193
    %v1270 = vunpack.c.l.b16 %v1194
    %v1271 = vunpack.c.h.b16 %v1194
    %v1272 = vunpack.c.l.b16 %v1195
    %v1273 = vunpack.c.h.b16 %v1195
    %v1274 = vunpack.c.l.b16 %v1196
    %v1275 = vunpack.c.h.b16 %v1196
    %v1276 = vunpack.c.l.b16 %v1197
    %v1277 = vunpack.c.h.b16 %v1197
    %v1278 = vunpack.c.l.b16 %v1198
    %v1279 = vunpack.c.h.b16 %v1198
    %v1280 = vunpack.c.l.b16 %v1199
    %v1281 = vunpack.c.h.b16 %v1199
    %v1282 = vunpack.c.l.b16 %v1200
    %v1283 = vunpack.c.h.b16 %v1200
    %v1284 = vunpack.c.l.b16 %v1201
    %v1285 = vunpack.c.h.b16 %v1201
    %v1286 = vunpack.c.l.b16 %v1202
    %v1287 = vunpack.c.h.b16 %v1202
    %v1288 = vunpack.c.l.b16 %v1203
    %v1289 = vunpack.c.h.b16 %v1203
    %v1290 = vunpack.c.l.b16 %v1204
    %v1291 = vunpack.c.h.b16 %v1204
    %v1292 = vunpack.c.l.b16 %v1205
    %v1293 = vunpack.c.h.b16 %v1205
    %v1294 = vunpack.c.l.b16 %v1206
    %v1295 = vunpack.c.h.b16 %v1206
    %v1296 = vunpack.c.l.b16 %v1207
    %v1297 = vunpack.c.h.b16 %v1207
    %v1298 = vunpack.c.l.b16 %v1208
    %v1299 = vunpack.c.h.b16 %v1208
    %v1300 = vunpack.c.l.b16 %v1209
    %v1301 = vunpack.c.h.b16 %v1209
    %v1302 = vunpack.c.l.b16 %v1210
    %v1303 = vunpack.c.h.b16 %v1210
    %v1304 = vunpack.c.l.b16 %v1211
    %v1305 = vunpack.c.h.b16 %v1211
    %v1306 = vunpack.c.l.b16 %v1212
    %v1307 = vunpack.c.h.b16 %v1212
    %v1308 = vunpack.c.l.b16 %v1213
    %v1309 = vunpack.c.h.b16 %v1213
    %v1310 = vunpack.c.l.b16 %v1214
    %v1311 = vunpack.c.h.b16 %v1214
    %v1312 = vunpack.c.l.b16 %v1215
    %v1313 = vunpack.c.h.b16 %v1215
    %v1314 = vunpack.c.l.b16 %v1216
    %v1315 = vunpack.c.h.b16 %v1216
    %v1316 = vunpack.c.l.b16 %v1217
    %v1317 = vunpack.c.h.b16 %v1217
    %v1318 = vunpack.c.l.b16 %v1218
    %v1319 = vunpack.c.h.b16 %v1218
    %v1320 = vunpack.c.l.b16 %v1219
    %v1321 = vunpack.c.h.b16 %v1219
    %v1322 = vunpack.c.l.b16 %v1220
    %v1323 = vunpack.c.h.b16 %v1220
    %v1324 = vunpack.c.l.b16 %v1221
    %v1325 = vunpack.c.h.b16 %v1221
    %v1326 = vunpack.c.l.b16 %v1222
    %v1327 = vunpack.c.h.b16 %v1222
    %v1328 = vunpack.c.l.b16 %v1223
    %v1329 = vunpack.c.h.b16 %v1223
    %v1330 = vunpack.c.l.b16 %v1224
    %v1331 = vunpack.c.h.b16 %v1224
    %v1332 = vpack.c.b16 %v1270, %v1268
    %v1333 = vpack.c.b16 %v1271, %v1269
    %v1334 = vpack.c.b16 %v1274, %v1272
    %v1335 = vpack.c.b16 %v1275, %v1273
    %v1336 = vpack.c.b16 %v1278, %v1276
    %v1337 = vpack.c.b16 %v1279, %v1277
    %v1338 = vpack.c.b16 %v1282, %v1280
    %v1339 = vpack.c.b16 %v1283, %v1281
    %v1340 = vpack.c.b16 %v1286, %v1284
    %v1341 = vpack.c.b16 %v1287, %v1285
    %v1342 = vpack.c.b16 %v1290, %v1288
    %v1343 = vpack.c.b16 %v1291, %v1289
    %v1344 = vpack.c.b16 %v1294, %v1292
    %v1345 = vpack.c.b16 %v1295, %v1293
    %v1346 = vpack.c.b16 %v1298, %v1296
    %v1347 = vpack.c.b16 %v1299, %v1297
    %v1348 = vpack.c.b16 %v1302, %v1300
    %v1349 = vpack.c.b16 %v1303, %v1301
    %v1350 = vpack.c.b16 %v1306, %v1304
    %v1351 = vpack.c.b16 %v1307, %v1305
    %v1352 = vpack.c.b16 %v1310, %v1308
    %v1353 = vpack.c.b16 %v1311, %v1309
    %v1354 = vpack.c.b16 %v1314, %v1312
    %v1355 = vpack.c.b16 %v1315, %v1313
    %v1356 = vpack.c.b16 %v1318, %v1316
    %v1357 = vpack.c.b16 %v1319, %v1317
    %v1358 = vpack.c.b16 %v1322, %v1320
    %v1359 = vpack.c.b16 %v1323, %v1321
    %v1360 = vpack.c.b16 %v1326, %v1324
    %v1361 = vpack.c.b16 %v1327, %v1325
    %v1362 = vpack.c.b16 %v1330, %v1328
    %v1363 = vpack.c.b16 %v1331, %v1329
    %1396 = vmatprep.subr.bf16.mxu0 %v1333
    %1397 = vmatpush1.bf16.msra.mxu0 %v1332
    %1398 = vmatprep.subr.bf16.mxu0 %v1335
    %1399 = vmatpush1.bf16.msra.mxu0 %v1334
    %1400 = vmatprep.subr.bf16.mxu0 %v1337
    %1401 = vmatpush1.bf16.msra.mxu0 %v1336
    %1402 = vmatprep.subr.bf16.mxu0 %v1339
    %1403 = vmatpush1.bf16.msra.mxu0 %v1338
    %1404 = vmatprep.subr.bf16.mxu0 %v1341
    %1405 = vmatpush1.bf16.msra.mxu0 %v1340
    %1406 = vmatprep.subr.bf16.mxu0 %v1343
    %1407 = vmatpush1.bf16.msra.mxu0 %v1342
    %1408 = vmatprep.subr.bf16.mxu0 %v1345
    %1409 = vmatpush1.bf16.msra.mxu0 %v1344
    %1410 = vmatprep.subr.bf16.mxu0 %v1347
    %1411 = vmatpush1.bf16.msra.mxu0 %v1346
    %1412 = vmatprep.subr.bf16.mxu0 %v1349
    %1413 = vmatpush1.bf16.msra.mxu0 %v1348
    %1414 = vmatprep.subr.bf16.mxu0 %v1351
    %1415 = vmatpush1.bf16.msra.mxu0 %v1350
    %1416 = vmatprep.subr.bf16.mxu0 %v1353
    %1417 = vmatpush1.bf16.msra.mxu0 %v1352
    %1418 = vmatprep.subr.bf16.mxu0 %v1355
    %1419 = vmatpush1.bf16.msra.mxu0 %v1354
    %1420 = vmatprep.subr.bf16.mxu0 %v1357
    %1421 = vmatpush1.bf16.msra.mxu0 %v1356
    %1422 = vmatprep.subr.bf16.mxu0 %v1359
    %1423 = vmatpush1.bf16.msra.mxu0 %v1358
    %1424 = vmatprep.subr.bf16.mxu0 %v1361
    %1425 = vmatpush1.bf16.msra.mxu0 %v1360
    %1426 = vmatprep.subr.bf16.mxu0 %v1363
    %1427 = vmatpush1.bf16.msra.mxu0 %v1362
    %1428 = vmatprep.mubr.bf16.mxu0 %v1192
    %1429 = vmatmul.mubr.bf16.gmra.mrb[0].mxu0 %v1191
    %v1430 = vpop.f32.mrb[0].mxu0
    %v1431 = vadd.f32 %v1229, %v1430
    %v1432 = vpop.f32.mrb[0].mxu0
    %v1433 = vadd.f32 %v1233, %v1432
    %v1434 = vpop.f32.mrb[0].mxu0
    %v1435 = vpop.f32.mrb[0].mxu0
    %1436 = vdwg.mxu0
    %v1437 = vmax.f32 %v1431, 0.0
    %v1438 = vmax.f32 %v1433, 0.0
    %v1439 = vld [vmem:[%s7 + $0x9] sm:$0xf]
    %v1440 = vpack.c.bf16 %v1437, %v1437
    %v1441 = vpack.c.bf16 %v1438, %v1438
    %v1442 = vld [vmem:[#allocation13] sm:$0xff]
    %v1443 = vld [vmem:[#allocation13 + $0x8] sm:$0xff]
    %v1444 = vld [vmem:[#allocation13 + $0x10] sm:$0xff]
    %v1445 = vld [vmem:[#allocation13 + $0x18] sm:$0xff]
    %v1446 = vld [vmem:[#allocation13 + $0x20] sm:$0xff]
    %v1447 = vld [vmem:[#allocation13 + $0x28] sm:$0xff]
    %v1448 = vld [vmem:[#allocation13 + $0x30] sm:$0xff]
    %v1449 = vld [vmem:[#allocation13 + $0x38] sm:$0xff]
    %v1450 = vld [vmem:[#allocation13 + $0x40] sm:$0xff]
    %v1451 = vld [vmem:[#allocation13 + $0x48] sm:$0xff]
    %v1452 = vld [vmem:[#allocation13 + $0x50] sm:$0xff]
    %v1453 = vld [vmem:[#allocation13 + $0x58] sm:$0xff]
    %v1454 = vld [vmem:[#allocation13 + $0x60] sm:$0xff]
    %v1455 = vld [vmem:[#allocation13 + $0x68] sm:$0xff]
    %v1456 = vld [vmem:[#allocation13 + $0x70] sm:$0xff]
    %v1457 = vld [vmem:[#allocation13 + $0x78] sm:$0xff]
    %v1458 = vld [vmem:[#allocation13 + $0x80] sm:$0xff]
    %v1459 = vld [vmem:[#allocation13 + $0x88] sm:$0xff]
    %v1460 = vld [vmem:[#allocation13 + $0x90] sm:$0xff]
    %v1461 = vld [vmem:[#allocation13 + $0x98] sm:$0xff]
    %v1462 = vld [vmem:[#allocation13 + $0xa0] sm:$0xff]
    %v1463 = vld [vmem:[#allocation13 + $0xa8] sm:$0xff]
    %v1464 = vld [vmem:[#allocation13 + $0xb0] sm:$0xff]
    %v1465 = vld [vmem:[#allocation13 + $0xb8] sm:$0xff]
    %v1466 = vld [vmem:[#allocation13 + $0xc0] sm:$0xff]
    %v1467 = vld [vmem:[#allocation13 + $0xc8] sm:$0xff]
    %v1468 = vld [vmem:[#allocation13 + $0xd0] sm:$0xff]
    %v1469 = vld [vmem:[#allocation13 + $0xd8] sm:$0xff]
    %v1470 = vld [vmem:[#allocation13 + $0xe0] sm:$0xff]
    %v1471 = vld [vmem:[#allocation13 + $0xe8] sm:$0xff]
    %v1472 = vld [vmem:[#allocation13 + $0xf0] sm:$0xff]
    %v1473 = vld [vmem:[#allocation13 + $0xf8] sm:$0xff]
    %v1474 = vld [vmem:[#allocation13 + $0x100] sm:$0xff]
    %v1475 = vld [vmem:[#allocation13 + $0x108] sm:$0xff]
    %v1476 = vld [vmem:[#allocation13 + $0x110] sm:$0xff]
    %v1477 = vld [vmem:[#allocation13 + $0x118] sm:$0xff]
    %v1478 = vld [vmem:[#allocation13 + $0x120] sm:$0xff]
    %v1479 = vld [vmem:[#allocation13 + $0x128] sm:$0xff]
    %v1480 = vld [vmem:[#allocation13 + $0x130] sm:$0xff]
    %v1481 = vld [vmem:[#allocation13 + $0x138] sm:$0xff]
    %v1482 = vld [vmem:[#allocation13 + $0x140] sm:$0xff]
    %v1483 = vld [vmem:[#allocation13 + $0x148] sm:$0xff]
    %v1484 = vld [vmem:[#allocation13 + $0x150] sm:$0xff]
    %v1485 = vld [vmem:[#allocation13 + $0x158] sm:$0xff]
    %v1486 = vld [vmem:[#allocation13 + $0x160] sm:$0xff]
    %v1487 = vld [vmem:[#allocation13 + $0x168] sm:$0xff]
    %v1488 = vld [vmem:[#allocation13 + $0x170] sm:$0xff]
    %v1489 = vld [vmem:[#allocation13 + $0x178] sm:$0xff]
    %v1490 = vld [vmem:[#allocation13 + $0x180] sm:$0xff]
    %v1491 = vld [vmem:[#allocation13 + $0x188] sm:$0xff]
    %v1492 = vld [vmem:[#allocation13 + $0x190] sm:$0xff]
    %v1493 = vld [vmem:[#allocation13 + $0x198] sm:$0xff]
    %v1494 = vld [vmem:[#allocation13 + $0x1a0] sm:$0xff]
    %v1495 = vld [vmem:[#allocation13 + $0x1a8] sm:$0xff]
    %v1496 = vld [vmem:[#allocation13 + $0x1b0] sm:$0xff]
    %v1497 = vld [vmem:[#allocation13 + $0x1b8] sm:$0xff]
    %v1498 = vld [vmem:[#allocation13 + $0x1c0] sm:$0xff]
    %v1499 = vld [vmem:[#allocation13 + $0x1c8] sm:$0xff]
    %v1500 = vld [vmem:[#allocation13 + $0x1d0] sm:$0xff]
    %v1501 = vld [vmem:[#allocation13 + $0x1d8] sm:$0xff]
    %v1502 = vld [vmem:[#allocation13 + $0x1e0] sm:$0xff]
    %v1503 = vld [vmem:[#allocation13 + $0x1e8] sm:$0xff]
    %v1504 = vld [vmem:[#allocation13 + $0x1f0] sm:$0xff]
    %v1505 = vld [vmem:[#allocation13 + $0x1f8] sm:$0xff]
    %v1507 = vlaneseq
    %v1508 = vshrl.u32 %v1507, 7
    %v1509 = vsub.s32 0, %v1508
    %v1510 = vrot.slane %v1439, %v1509
    %v1511 = vlaneseq
    %v1512 = vshrl.u32 %v1511, 7
    %v1513 = vsub.s32 1, %v1512
    %v1514 = vrot.slane %v1439, %v1513
    %v1515 = vlaneseq
    %v1516 = vshrl.u32 %v1515, 7
    %v1517 = vsub.s32 2, %v1516
    %v1518 = vrot.slane %v1439, %v1517
    %v1519 = vlaneseq
    %v1520 = vshrl.u32 %v1519, 7
    %v1521 = vsub.s32 3, %v1520
    %v1522 = vrot.slane %v1439, %v1521
    %v1591 = vunpack.c.l.b16 %v1442
    %v1592 = vunpack.c.h.b16 %v1442
    %v1593 = vunpack.c.l.b16 %v1443
    %v1594 = vunpack.c.h.b16 %v1443
    %v1595 = vunpack.c.l.b16 %v1444
    %v1596 = vunpack.c.h.b16 %v1444
    %v1597 = vunpack.c.l.b16 %v1445
    %v1598 = vunpack.c.h.b16 %v1445
    %v1599 = vunpack.c.l.b16 %v1446
    %v1600 = vunpack.c.h.b16 %v1446
    %v1601 = vunpack.c.l.b16 %v1447
    %v1602 = vunpack.c.h.b16 %v1447
    %v1603 = vunpack.c.l.b16 %v1448
    %v1604 = vunpack.c.h.b16 %v1448
    %v1605 = vunpack.c.l.b16 %v1449
    %v1606 = vunpack.c.h.b16 %v1449
    %v1607 = vunpack.c.l.b16 %v1450
    %v1608 = vunpack.c.h.b16 %v1450
    %v1609 = vunpack.c.l.b16 %v1451
    %v1610 = vunpack.c.h.b16 %v1451
    %v1611 = vunpack.c.l.b16 %v1452
    %v1612 = vunpack.c.h.b16 %v1452
    %v1613 = vunpack.c.l.b16 %v1453
    %v1614 = vunpack.c.h.b16 %v1453
    %v1615 = vunpack.c.l.b16 %v1454
    %v1616 = vunpack.c.h.b16 %v1454
    %v1617 = vunpack.c.l.b16 %v1455
    %v1618 = vunpack.c.h.b16 %v1455
    %v1619 = vunpack.c.l.b16 %v1456
    %v1620 = vunpack.c.h.b16 %v1456
    %v1621 = vunpack.c.l.b16 %v1457
    %v1622 = vunpack.c.h.b16 %v1457
    %v1623 = vunpack.c.l.b16 %v1458
    %v1624 = vunpack.c.h.b16 %v1458
    %v1625 = vunpack.c.l.b16 %v1459
    %v1626 = vunpack.c.h.b16 %v1459
    %v1627 = vunpack.c.l.b16 %v1460
    %v1628 = vunpack.c.h.b16 %v1460
    %v1629 = vunpack.c.l.b16 %v1461
    %v1630 = vunpack.c.h.b16 %v1461
    %v1631 = vunpack.c.l.b16 %v1462
    %v1632 = vunpack.c.h.b16 %v1462
    %v1633 = vunpack.c.l.b16 %v1463
    %v1634 = vunpack.c.h.b16 %v1463
    %v1635 = vunpack.c.l.b16 %v1464
    %v1636 = vunpack.c.h.b16 %v1464
    %v1637 = vunpack.c.l.b16 %v1465
    %v1638 = vunpack.c.h.b16 %v1465
    %v1639 = vunpack.c.l.b16 %v1466
    %v1640 = vunpack.c.h.b16 %v1466
    %v1641 = vunpack.c.l.b16 %v1467
    %v1642 = vunpack.c.h.b16 %v1467
    %v1643 = vunpack.c.l.b16 %v1468
    %v1644 = vunpack.c.h.b16 %v1468
    %v1645 = vunpack.c.l.b16 %v1469
    %v1646 = vunpack.c.h.b16 %v1469
    %v1647 = vunpack.c.l.b16 %v1470
    %v1648 = vunpack.c.h.b16 %v1470
    %v1649 = vunpack.c.l.b16 %v1471
    %v1650 = vunpack.c.h.b16 %v1471
    %v1651 = vunpack.c.l.b16 %v1472
    %v1652 = vunpack.c.h.b16 %v1472
    %v1653 = vunpack.c.l.b16 %v1473
    %v1654 = vunpack.c.h.b16 %v1473
    %v1655 = vunpack.c.l.b16 %v1474
    %v1656 = vunpack.c.h.b16 %v1474
    %v1657 = vunpack.c.l.b16 %v1475
    %v1658 = vunpack.c.h.b16 %v1475
    %v1659 = vunpack.c.l.b16 %v1476
    %v1660 = vunpack.c.h.b16 %v1476
    %v1661 = vunpack.c.l.b16 %v1477
    %v1662 = vunpack.c.h.b16 %v1477
    %v1663 = vunpack.c.l.b16 %v1478
    %v1664 = vunpack.c.h.b16 %v1478
    %v1665 = vunpack.c.l.b16 %v1479
    %v1666 = vunpack.c.h.b16 %v1479
    %v1667 = vunpack.c.l.b16 %v1480
    %v1668 = vunpack.c.h.b16 %v1480
    %v1669 = vunpack.c.l.b16 %v1481
    %v1670 = vunpack.c.h.b16 %v1481
    %v1671 = vunpack.c.l.b16 %v1482
    %v1672 = vunpack.c.h.b16 %v1482
    %v1673 = vunpack.c.l.b16 %v1483
    %v1674 = vunpack.c.h.b16 %v1483
    %v1675 = vunpack.c.l.b16 %v1484
    %v1676 = vunpack.c.h.b16 %v1484
    %v1677 = vunpack.c.l.b16 %v1485
    %v1678 = vunpack.c.h.b16 %v1485
    %v1679 = vunpack.c.l.b16 %v1486
    %v1680 = vunpack.c.h.b16 %v1486
    %v1681 = vunpack.c.l.b16 %v1487
    %v1682 = vunpack.c.h.b16 %v1487
    %v1683 = vunpack.c.l.b16 %v1488
    %v1684 = vunpack.c.h.b16 %v1488
    %v1685 = vunpack.c.l.b16 %v1489
    %v1686 = vunpack.c.h.b16 %v1489
    %v1687 = vunpack.c.l.b16 %v1490
    %v1688 = vunpack.c.h.b16 %v1490
    %v1689 = vunpack.c.l.b16 %v1491
    %v1690 = vunpack.c.h.b16 %v1491
    %v1691 = vunpack.c.l.b16 %v1492
    %v1692 = vunpack.c.h.b16 %v1492
    %v1693 = vunpack.c.l.b16 %v1493
    %v1694 = vunpack.c.h.b16 %v1493
    %v1695 = vunpack.c.l.b16 %v1494
    %v1696 = vunpack.c.h.b16 %v1494
    %v1697 = vunpack.c.l.b16 %v1495
    %v1698 = vunpack.c.h.b16 %v1495
    %v1699 = vunpack.c.l.b16 %v1496
    %v1700 = vunpack.c.h.b16 %v1496
    %v1701 = vunpack.c.l.b16 %v1497
    %v1702 = vunpack.c.h.b16 %v1497
    %v1703 = vunpack.c.l.b16 %v1498
    %v1704 = vunpack.c.h.b16 %v1498
    %v1705 = vunpack.c.l.b16 %v1499
    %v1706 = vunpack.c.h.b16 %v1499
    %v1707 = vunpack.c.l.b16 %v1500
    %v1708 = vunpack.c.h.b16 %v1500
    %v1709 = vunpack.c.l.b16 %v1501
    %v1710 = vunpack.c.h.b16 %v1501
    %v1711 = vunpack.c.l.b16 %v1502
    %v1712 = vunpack.c.h.b16 %v1502
    %v1713 = vunpack.c.l.b16 %v1503
    %v1714 = vunpack.c.h.b16 %v1503
    %v1715 = vunpack.c.l.b16 %v1504
    %v1716 = vunpack.c.h.b16 %v1504
    %v1717 = vunpack.c.l.b16 %v1505
    %v1718 = vunpack.c.h.b16 %v1505
    %v1719 = vpack.c.b16 %v1595, %v1591
    %v1720 = vpack.c.b16 %v1596, %v1592
    %v1721 = vpack.c.b16 %v1597, %v1593
    %v1722 = vpack.c.b16 %v1598, %v1594
    %v1723 = vpack.c.b16 %v1603, %v1599
    %v1724 = vpack.c.b16 %v1604, %v1600
    %v1725 = vpack.c.b16 %v1605, %v1601
    %v1726 = vpack.c.b16 %v1606, %v1602
    %v1727 = vpack.c.b16 %v1611, %v1607
    %v1728 = vpack.c.b16 %v1612, %v1608
    %v1729 = vpack.c.b16 %v1613, %v1609
    %v1730 = vpack.c.b16 %v1614, %v1610
    %v1731 = vpack.c.b16 %v1619, %v1615
    %v1732 = vpack.c.b16 %v1620, %v1616
    %v1733 = vpack.c.b16 %v1621, %v1617
    %v1734 = vpack.c.b16 %v1622, %v1618
    %v1735 = vpack.c.b16 %v1627, %v1623
    %v1736 = vpack.c.b16 %v1628, %v1624
    %v1737 = vpack.c.b16 %v1629, %v1625
    %v1738 = vpack.c.b16 %v1630, %v1626
    %v1739 = vpack.c.b16 %v1635, %v1631
    %v1740 = vpack.c.b16 %v1636, %v1632
    %v1741 = vpack.c.b16 %v1637, %v1633
    %v1742 = vpack.c.b16 %v1638, %v1634
    %v1743 = vpack.c.b16 %v1643, %v1639
    %v1744 = vpack.c.b16 %v1644, %v1640
    %v1745 = vpack.c.b16 %v1645, %v1641
    %v1746 = vpack.c.b16 %v1646, %v1642
    %v1747 = vpack.c.b16 %v1651, %v1647
    %v1748 = vpack.c.b16 %v1652, %v1648
    %v1749 = vpack.c.b16 %v1653, %v1649
    %v1750 = vpack.c.b16 %v1654, %v1650
    %v1751 = vpack.c.b16 %v1659, %v1655
    %v1752 = vpack.c.b16 %v1660, %v1656
    %v1753 = vpack.c.b16 %v1661, %v1657
    %v1754 = vpack.c.b16 %v1662, %v1658
    %v1755 = vpack.c.b16 %v1667, %v1663
    %v1756 = vpack.c.b16 %v1668, %v1664
    %v1757 = vpack.c.b16 %v1669, %v1665
    %v1758 = vpack.c.b16 %v1670, %v1666
    %v1759 = vpack.c.b16 %v1675, %v1671
    %v1760 = vpack.c.b16 %v1676, %v1672
    %v1761 = vpack.c.b16 %v1677, %v1673
    %v1762 = vpack.c.b16 %v1678, %v1674
    %v1763 = vpack.c.b16 %v1683, %v1679
    %v1764 = vpack.c.b16 %v1684, %v1680
    %v1765 = vpack.c.b16 %v1685, %v1681
    %v1766 = vpack.c.b16 %v1686, %v1682
    %v1767 = vpack.c.b16 %v1691, %v1687
    %v1768 = vpack.c.b16 %v1692, %v1688
    %v1769 = vpack.c.b16 %v1693, %v1689
    %v1770 = vpack.c.b16 %v1694, %v1690
    %v1771 = vpack.c.b16 %v1699, %v1695
    %v1772 = vpack.c.b16 %v1700, %v1696
    %v1773 = vpack.c.b16 %v1701, %v1697
    %v1774 = vpack.c.b16 %v1702, %v1698
    %v1775 = vpack.c.b16 %v1707, %v1703
    %v1776 = vpack.c.b16 %v1708, %v1704
    %v1777 = vpack.c.b16 %v1709, %v1705
    %v1778 = vpack.c.b16 %v1710, %v1706
    %v1779 = vpack.c.b16 %v1715, %v1711
    %v1780 = vpack.c.b16 %v1716, %v1712
    %v1781 = vpack.c.b16 %v1717, %v1713
    %v1782 = vpack.c.b16 %v1718, %v1714
    %1847 = vmatprep.subr.bf16.mxu0 %v1720
    %1848 = vmatpush1.bf16.msra.mxu0 %v1719
    %1849 = vmatprep.subr.bf16.mxu0 %v1724
    %1850 = vmatpush1.bf16.msra.mxu0 %v1723
    %1851 = vmatprep.subr.bf16.mxu0 %v1728
    %1852 = vmatpush1.bf16.msra.mxu0 %v1727
    %1853 = vmatprep.subr.bf16.mxu0 %v1732
    %1854 = vmatpush1.bf16.msra.mxu0 %v1731
    %1855 = vmatprep.subr.bf16.mxu0 %v1736
    %1856 = vmatpush1.bf16.msra.mxu0 %v1735
    %1857 = vmatprep.subr.bf16.mxu0 %v1740
    %1858 = vmatpush1.bf16.msra.mxu0 %v1739
    %1859 = vmatprep.subr.bf16.mxu0 %v1744
    %1860 = vmatpush1.bf16.msra.mxu0 %v1743
    %1861 = vmatprep.subr.bf16.mxu0 %v1748
    %1862 = vmatpush1.bf16.msra.mxu0 %v1747
    %1863 = vmatprep.subr.bf16.mxu0 %v1752
    %1864 = vmatpush1.bf16.msra.mxu0 %v1751
    %1865 = vmatprep.subr.bf16.mxu0 %v1756
    %1866 = vmatpush1.bf16.msra.mxu0 %v1755
    %1867 = vmatprep.subr.bf16.mxu0 %v1760
    %1868 = vmatpush1.bf16.msra.mxu0 %v1759
    %1869 = vmatprep.subr.bf16.mxu0 %v1764
    %1870 = vmatpush1.bf16.msra.mxu0 %v1763
    %1871 = vmatprep.subr.bf16.mxu0 %v1768
    %1872 = vmatpush1.bf16.msra.mxu0 %v1767
    %1873 = vmatprep.subr.bf16.mxu0 %v1772
    %1874 = vmatpush1.bf16.msra.mxu0 %v1771
    %1875 = vmatprep.subr.bf16.mxu0 %v1776
    %1876 = vmatpush1.bf16.msra.mxu0 %v1775
    %1877 = vmatprep.subr.bf16.mxu0 %v1780
    %1878 = vmatpush1.bf16.msra.mxu0 %v1779
    %1879 = vmatprep.mubr.bf16.mxu0 %v1441
    %1880 = vmatmul.mubr.bf16.gmra.mrb[0].mxu0 %v1440
    %v1881 = vpop.f32.mrb[0].mxu0
    %v1882 = vadd.f32 %v1510, %v1881
    %v1883 = vpop.f32.mrb[0].mxu0
    %v1884 = vadd.f32 %v1514, %v1883
    %v1885 = vpop.f32.mrb[0].mxu0
    %v1886 = vpop.f32.mrb[0].mxu0
    %1887 = vdwg.mxu0
    %1888 = vmatprep.subr.bf16.mxu0 %v1722
    %1889 = vmatpush1.bf16.msra.mxu0 %v1721
    %1890 = vmatprep.subr.bf16.mxu0 %v1726
    %1891 = vmatpush1.bf16.msra.mxu0 %v1725
    %1892 = vmatprep.subr.bf16.mxu0 %v1730
    %1893 = vmatpush1.bf16.msra.mxu0 %v1729
    %1894 = vmatprep.subr.bf16.mxu0 %v1734
    %1895 = vmatpush1.bf16.msra.mxu0 %v1733
    %1896 = vmatprep.subr.bf16.mxu0 %v1738
    %1897 = vmatpush1.bf16.msra.mxu0 %v1737
    %1898 = vmatprep.subr.bf16.mxu0 %v1742
    %1899 = vmatpush1.bf16.msra.mxu0 %v1741
    %1900 = vmatprep.subr.bf16.mxu0 %v1746
    %1901 = vmatpush1.bf16.msra.mxu0 %v1745
    %1902 = vmatprep.subr.bf16.mxu0 %v1750
    %1903 = vmatpush1.bf16.msra.mxu0 %v1749
    %1904 = vmatprep.subr.bf16.mxu0 %v1754
    %1905 = vmatpush1.bf16.msra.mxu0 %v1753
    %1906 = vmatprep.subr.bf16.mxu0 %v1758
    %1907 = vmatpush1.bf16.msra.mxu0 %v1757
    %1908 = vmatprep.subr.bf16.mxu0 %v1762
    %1909 = vmatpush1.bf16.msra.mxu0 %v1761
    %1910 = vmatprep.subr.bf16.mxu0 %v1766
    %1911 = vmatpush1.bf16.msra.mxu0 %v1765
    %1912 = vmatprep.subr.bf16.mxu0 %v1770
    %1913 = vmatpush1.bf16.msra.mxu0 %v1769
    %1914 = vmatprep.subr.bf16.mxu0 %v1774
    %1915 = vmatpush1.bf16.msra.mxu0 %v1773
    %1916 = vmatprep.subr.bf16.mxu0 %v1778
    %1917 = vmatpush1.bf16.msra.mxu0 %v1777
    %1918 = vmatprep.subr.bf16.mxu0 %v1782
    %1919 = vmatpush1.bf16.msra.mxu0 %v1781
    %1920 = vmatprep.mubr.bf16.mxu0 %v1441
    %1921 = vmatmul.mubr.bf16.gmra.mrb[0].mxu0 %v1440
    %v1922 = vpop.f32.mrb[0].mxu0
    %v1923 = vadd.f32 %v1518, %v1922
    %v1924 = vpop.f32.mrb[0].mxu0
    %v1925 = vadd.f32 %v1522, %v1924
    %v1926 = vpop.f32.mrb[0].mxu0
    %v1927 = vpop.f32.mrb[0].mxu0
    %1928 = vdwg.mxu0
    %1929 = vst [vmem:[#allocation14] sm:$0xff] %v1882
    %1930 = vst [vmem:[#allocation14 + $0x8] sm:$0xff] %v1884
    %1931 = vst [vmem:[#allocation14 + $0x10] sm:$0xff] %v1923
    %1932 = vst [vmem:[#allocation14 + $0x18] sm:$0xff] %v1925
    // Predicated region
    $region62: #{tpu_custom_call.1} parent=1 // pred_check
      _
    $region63: #{tpu_custom_call.1} parent=1 // pred_check_branch
      %1934 = sbr.rel (0) target = $region65
    $region64: #{tpu_custom_call.1} parent=1 // pred_region
      %s1936 = ssub.s32 512, 512
      %1937 = vsyncadd [#allocation4], %s1936
      %s1939 = sshll.u32 [#allocation14], 4
      %s1940 = int_to_ptr.vmem [resolvable:$true] %s1939
      %1942 = dma.vmem_to_hbm [thread:$0]  %s1940, 512, %s8, [#allocation4]
    $region65: #{tpu_custom_call.1} parent=1 // pred_fallthru
      _
    // Predicated region
    $region66: #{tpu_custom_call.1} parent=1 // pred_check
      _
    $region67: #{tpu_custom_call.1} parent=1 // pred_check_branch
      %1944 = sbr.rel (0) target = $region69
    $region68: #{tpu_custom_call.1} parent=1 // pred_region
      %1945 = dma.done [#allocation4], 512
    $region69: #{tpu_custom_call.1} parent=1 // pred_fallthru
      _
    %1946 = vsyncpa [#allocation3], 1
    %1947 = vsyncpa [#allocation6], 1
    %1948 = vsyncpa [#allocation9], 1
    %1949 = vsyncpa [#allocation12], 1
    %1950 = vsyncpa [#allocation4], 1

</llo_original>
